<compile_context>
chip_gen: v6e
topology: v6e:2x2x1
jax: 0.10.0
libtpu: 0.0.40
codegen_flags: <defaults>
</compile_context>

<pallas_src>
import functools

import jax
import jax.numpy as jnp
from jax.experimental import pallas as pl
from jax.experimental.pallas import tpu as pltpu


# ----------------------------- fused kernel: one (batch, head) per grid step -----------------------------
def _rel_mha_head_kernel(x_ref, pos_ref, wqkv_ref, wr_ref, rw_ref, rr_ref, wo_ref,
                         g_ref, beta_ref, *rest, head_dim, batch_size, eps, causal):
    if causal:
        out_ref, o_acc = rest
        mask_ref = None
    else:
        mask_ref, out_ref, o_acc = rest

    f32, bf16 = jnp.float32, jnp.bfloat16
    S = x_ref.shape[1]
    D = head_dim
    n = pl.program_id(1)

    @pl.when(n == 0)
    def _init():
        o_acc[...] = jnp.zeros_like(o_acc)

    x_bf = x_ref[0].astype(bf16)                                             # [S, H]

    # per-head fused projection (q|k|v) and relative projection: bf16 MXU inputs, f32 accumulation
    qkv = jnp.dot(x_bf, wqkv_ref[0], preferred_element_type=f32)             # [S, 3D]
    rel = jnp.dot(pos_ref[...], wr_ref[0], preferred_element_type=f32)       # [S, D]

    q = qkv[:, :D]                           # attention scale already folded into wq / rw / rr
    k = qkv[:, D:2 * D]
    v = qkv[:, 2 * D:]

    rwq = (q + rw_ref[0]).astype(bf16)
    rrq = (q + rr_ref[0]).astype(bf16)
    k_bf = k.astype(bf16)
    v_bf = v.astype(bf16)
    r_bf = rel.astype(bf16)

    dn = (((1,), (1,)), ((), ()))            # contract head_dim of both operands
    ac = jax.lax.dot_general(rwq, k_bf, dn, preferred_element_type=f32)      # [S, S]
    bd_raw = jax.lax.dot_general(rrq, r_bf, dn, preferred_element_type=f32)  # [S, S]

    # Reference left-shift (pad/flatten/view): row q rotated right by q+1 gives
    #   low[q, k] = bd_raw[q, k + S-1-q]  for k <= q   (the only slots a causal mask keeps)
    low = pltpu.roll(bd_raw, 1, axis=1, stride=1, stride_axis=0)

    q_idx = jax.lax.broadcasted_iota(jnp.int32, (S, S), 0)
    k_idx = jax.lax.broadcasted_iota(jnp.int32, (S, S), 1)

    if causal:
        # Fast path: all k>q (and k-q>S-B) slots are killed by the -1e30 bias, so the single
        # strided roll IS the shift, and the mask bias is generated here (no HBM mask input).
        scores = jnp.where(k_idx > q_idx, -1e30, ac + low)
    else:
        upper = k_idx > q_idx
        keep = (k_idx - q_idx) <= (S - batch_size)      # verbatim reference tril(ones, ks - batch)
        sel_low = jnp.logical_and(jnp.logical_not(upper), keep)
        sel_high = jnp.logical_and(jnp.logical_and(upper, k_idx != q_idx + 1), keep)
        high = pltpu.roll(low, S - 1, axis=0)           # rows shifted up by one
        bd = jnp.where(sel_low, low, jnp.where(sel_high, high, 0.0))
        scores = ac + bd
        scores = jnp.where(mask_ref[0] != 0, -1e30, scores)   # user mask, nonzero == masked

    # f32 softmax over keys (dropatt = identity)
    m = jnp.max(scores, axis=-1, keepdims=True)
    e = jnp.exp(scores - m)
    den = jnp.sum(e, axis=-1, keepdims=True)
    prob = (e * pl.reciprocal(den, approx=True)).astype(bf16)

    att = jnp.dot(prob, v_bf, preferred_element_type=f32)                    # [S, D]
    o_acc[...] += jnp.dot(att.astype(bf16), wo_ref[0],
                          preferred_element_type=f32)                        # [S, H]

    @pl.when(n == pl.num_programs(1) - 1)
    def _finalize():
        resid = x_ref[0] + o_acc[...]                   # dropout = identity (inference)
        mu = jnp.mean(resid, axis=-1, keepdims=True)
        var = jnp.mean(jnp.square(resid - mu), axis=-1, keepdims=True)
        norm = (resid - mu) * jax.lax.rsqrt(var + eps)
        out_ref[0] = (norm * g_ref[...] + beta_ref[...]).astype(out_ref.dtype)


# ------------------------------------------ host wrapper ------------------------------------------
def rel_multihead_att_forward(x, mask, pos_emb, rr_bias, rw_bias, params, n_head, head_dim,
                              *, causal_mask=False, out_dtype=jnp.float32):
    B, S, H = x.shape
    N, D = n_head, head_dim
    ND = N * D
    scale = 1.0 / (D ** 0.5)
    f32, bf16 = jnp.float32, jnp.bfloat16

    x = x.astype(f32)

    def per_head(w_t):                        # [H, N*D] -> [N, H, D]  (head-major)
        return w_t.reshape(H, N, D).transpose(1, 0, 2)

    # torch nn.Linear weight is [out_features, in_features]
    wq_t = params["Wq"].astype(f32).T * scale                     # scale folded into q weights
    wk_t = params["Wkv"][:ND].astype(f32).T
    wv_t = params["Wkv"][ND:].astype(f32).T
    wqkv_h = jnp.concatenate([per_head(wq_t), per_head(wk_t), per_head(wv_t)],
                             axis=2).astype(bf16)                 # [N, H, 3D]  q|k|v per head
    wr_h = per_head(params["Wr"].astype(f32).T).astype(bf16)      # [N, H, D]
    wo_h = params["Wo"].astype(f32).T.reshape(N, D, H).astype(bf16)  # [N, D, H]
    rw = (rw_bias.astype(f32) * scale).reshape(N, 1, D)           # pre-scaled per-head biases
    rr = (rr_bias.astype(f32) * scale).reshape(N, 1, D)
    pos_bf = pos_emb.astype(bf16)
    gamma = params["ln_g"].reshape(1, H).astype(f32)
    beta = params["ln_b"].reshape(1, H).astype(f32)

    in_specs = [
        pl.BlockSpec((1, S, H), lambda b, n: (b, 0, 0)),          # x (f32: matmul input + residual)
        pl.BlockSpec((S, H), lambda b, n: (0, 0)),                # pos_emb (bf16)
        pl.BlockSpec((1, H, 3 * D), lambda b, n: (n, 0, 0)),      # head-major fused q|k|v weights
        pl.BlockSpec((1, H, D), lambda b, n: (n, 0, 0)),          # head-major r weights
        pl.BlockSpec((1, 1, D), lambda b, n: (n, 0, 0)),          # rw bias (pre-scaled, f32)
        pl.BlockSpec((1, 1, D), lambda b, n: (n, 0, 0)),          # rr bias (pre-scaled, f32)
        pl.BlockSpec((1, D, H), lambda b, n: (n, 0, 0)),          # head-major o_net weight
        pl.BlockSpec((1, H), lambda b, n: (0, 0)),                # LN gamma
        pl.BlockSpec((1, H), lambda b, n: (0, 0)),                # LN beta
    ]
    args = [x, pos_bf, wqkv_h, wr_h, rw, rr, wo_h, gamma, beta]

    if not causal_mask:
        # General path: per-batch int8 mask (nonzero == masked); fetched once per batch step
        # because the inner head axis keeps the block index constant.
        mask_i8 = jnp.broadcast_to(mask.astype(bool), (B, S, S)).astype(jnp.int8)
        in_specs.append(pl.BlockSpec((1, S, S), lambda b, n: (b, 0, 0)))
        args.append(mask_i8)

    # per-step VMEM footprint estimate (f32 [S,S] temporaries dominate); cap at 64 MiB for v7x
    est = (10 * S * S * 4                                   # per-head score/exp/roll temporaries
           + 2 * 2 * S * H * 4                              # x + out blocks, double-buffered
           + 2 * S * H * 2                                  # pos_emb (bf16)
           + 4 * (H * 3 * D + H * D + D * H)                # per-head weight blocks (bf16, x2 buf)
           + S * H * 4                                      # o_acc scratch
           + (0 if causal_mask else 2 * S * S))             # int8 mask block, double-buffered
    vmem_limit = int(min(64 * 1024 * 1024, max(32 * 1024 * 1024, 1.5 * est)))

    kernel = functools.partial(_rel_mha_head_kernel, head_dim=D, batch_size=B,
                               eps=1e-5, causal=causal_mask)

    return pl.pallas_call(
        kernel,
        out_shape=jax.ShapeDtypeStruct((B, S, H), out_dtype),
        grid_spec=pltpu.PrefetchScalarGridSpec(
            num_scalar_prefetch=0,
            grid=(B, N),
            in_specs=in_specs,
            out_specs=pl.BlockSpec((1, S, H), lambda b, n: (b, 0, 0)),
            scratch_shapes=[pltpu.VMEM((S, H), f32)]),      # per-batch o-projection accumulator
        compiler_params=pltpu.CompilerParams(
            dimension_semantics=("parallel", "arbitrary"),
            vmem_limit_bytes=vmem_limit),
    )(*args)


# ----------------------------- pure-JAX reference (mirrors the PyTorch code) -----------------------------
def _reference_forward(x, mask, pos_emb, rr_bias, rw_bias, params, n_head, head_dim, eps=1e-5):
    B, S, H = x.shape
    N, D = n_head, head_dim
    scale = 1.0 / (D ** 0.5)
    kv = x @ params["Wkv"].T
    key, value = kv[..., :N * D], kv[..., N * D:]
    query = x @ params["Wq"].T
    rel = pos_emb @ params["Wr"].T
    k = key.reshape(B, S, N, D)
    v = value.reshape(B, S, N, D)
    q = query.reshape(B, S, N, D)
    r = rel.reshape(S, N, D)
    AC = jnp.einsum('bqnd,bknd->bqkn', q + rw_bias[None, None], k)
    BD = jnp.einsum('bqnd,knd->bqkn', q + rr_bias[None, None], r)
    # _left_shift (verbatim reference semantics, including the `ks - batch` tril diagonal)
    bs, qs, ks_, hs = BD.shape
    zero_pad = jnp.zeros((bs, qs, 1, hs), BD.dtype)
    xp = jnp.concatenate([zero_pad, BD], axis=2).reshape(bs, ks_ + 1, qs, hs)
    BD = xp[:, 1:].reshape(bs, qs, ks_, hs)
    BD = BD * jnp.tril(jnp.ones((qs, ks_), BD.dtype), ks_ - bs)[None, :, :, None]
    att = (AC + BD) * scale
    att = jnp.where(mask[..., None], -jnp.inf, att)
    prob = jax.nn.softmax(att, axis=2)
    attended = jnp.einsum('bqkn,bknd->bqnd', prob, v)
    out = attended.reshape(B, S, N * D) @ params["Wo"].T
    out = x + out
    mu = out.mean(-1, keepdims=True)
    var = ((out - mu) ** 2).mean(-1, keepdims=True)
    return (out - mu) / jnp.sqrt(var + eps) * params["ln_g"] + params["ln_b"]


# --------------------------------------------- main ---------------------------------------------
if __name__ == "__main__":
    # batch, seq, hidden, n_head, head_dim  (hidden == n_head * head_dim); lane-friendly small sizes
    B, S, H, N, D = 2, 128, 128, 4, 32
    keys = jax.random.split(jax.random.PRNGKey(0), 8)

    x = jax.random.normal(keys[0], (B, S, H), jnp.float32)
    pos_emb = jax.random.normal(keys[1], (S, H), jnp.float32)   # mem is None -> pos len == q_len
    rr_bias = jax.random.normal(keys[2], (N, D), jnp.float32) * 0.02
    rw_bias = jax.random.normal(keys[3], (N, D), jnp.float32) * 0.02

    params = {
        "Wq": jax.random.normal(keys[4], (N * D, H), jnp.float32) * 0.05,      # q_net.weight
        "Wkv": jax.random.normal(keys[5], (2 * N * D, H), jnp.float32) * 0.05,  # kv_net.weight
        "Wr": jax.random.normal(keys[6], (N * D, H), jnp.float32) * 0.05,      # r_net.weight
        "Wo": jax.random.normal(keys[7], (H, N * D), jnp.float32) * 0.05,      # o_net.weight
        "ln_g": jnp.ones((H,), jnp.float32),
        "ln_b": jnp.zeros((H,), jnp.float32),
    }

    # causal mask: True (=masked) where the key is in the future
    qi = jnp.arange(S)[:, None]
    ki = jnp.arange(S)[None, :]
    mask = jnp.broadcast_to(ki > qi, (B, S, S))

    ref = jax.block_until_ready(
        _reference_forward(x, mask, pos_emb, rr_bias, rw_bias, params, N, D))

    # 1) causal fast path (no mask DMA, single strided roll)
    out_fast = jax.block_until_ready(
        rel_multihead_att_forward(x, mask, pos_emb, rr_bias, rw_bias, params, N, D,
                                  causal_mask=True))
    # 2) general path (arbitrary user mask, exact reference shift)
    out_gen = jax.block_until_ready(
        rel_multihead_att_forward(x, mask, pos_emb, rr_bias, rw_bias, params, N, D,
                                  causal_mask=False))

    for out in (out_fast, out_gen):
        assert out.shape == (B, S, H)
        assert bool(jnp.all(jnp.isfinite(out)))
        max_diff = float(jnp.max(jnp.abs(out - ref)))
        assert max_diff < 0.1, max_diff      # bf16 MXU path vs f32 reference
    print("KERNEL_OK")
</pallas_src>

<mosaic_0001>
module attributes {stable_mosaic.version = 11 : i64} {
  func.func @_rel_mha_head_kernel(%arg0: i32, %arg1: i32, %arg2: memref<1x128x128xf32, #tpu.memory_space<vmem>>, %arg3: memref<128x128xbf16, #tpu.memory_space<vmem>>, %arg4: memref<1x128x96xbf16, #tpu.memory_space<vmem>>, %arg5: memref<1x128x32xbf16, #tpu.memory_space<vmem>>, %arg6: memref<1x1x32xf32, #tpu.memory_space<vmem>>, %arg7: memref<1x1x32xf32, #tpu.memory_space<vmem>>, %arg8: memref<1x32x128xbf16, #tpu.memory_space<vmem>>, %arg9: memref<1x128xf32, #tpu.memory_space<vmem>>, %arg10: memref<1x128xf32, #tpu.memory_space<vmem>>, %arg11: memref<1x128x128xf32, #tpu.memory_space<vmem>>, %arg12: memref<128x128xf32, #tpu.memory_space<vmem>>) attributes {dimension_semantics = [#tpu.dimension_semantics<parallel>, #tpu.dimension_semantics<arbitrary>], iteration_bounds = array<i64: 2, 4>, scalar_prefetch = 0 : i64, scratch_operands = 1 : i64, tpu.core_type = #tpu.core_type<tc>, window_params = [{transform_indices = @transform_0, window_bounds = array<i64: 1, 128, 128>}, {pipeline_mode = #tpu.pipeline_mode<synchronous>, transform_indices = @transform_1, window_bounds = array<i64: 128, 128>}, {transform_indices = @transform_2, window_bounds = array<i64: 1, 128, 96>}, {transform_indices = @transform_3, window_bounds = array<i64: 1, 128, 32>}, {transform_indices = @transform_4, window_bounds = array<i64: 1, 1, 32>}, {transform_indices = @transform_5, window_bounds = array<i64: 1, 1, 32>}, {transform_indices = @transform_6, window_bounds = array<i64: 1, 32, 128>}, {pipeline_mode = #tpu.pipeline_mode<synchronous>, transform_indices = @transform_7, window_bounds = array<i64: 1, 128>}, {pipeline_mode = #tpu.pipeline_mode<synchronous>, transform_indices = @transform_8, window_bounds = array<i64: 1, 128>}, {transform_indices = @transform_9, window_bounds = array<i64: 1, 128, 128>}]} {
    %c0_i32 = arith.constant 0 : i32
    %0 = arith.cmpi eq, %arg1, %c0_i32 : i32
    %1 = arith.extui %0 : i1 to i32
    %c0_i32_0 = arith.constant 0 : i32
    %2 = arith.cmpi ne, %1, %c0_i32_0 : i32
    scf.if %2 {
      %cst_33 = arith.constant 0.000000e+00 : f32
      %60 = vector.broadcast %cst_33 : f32 to vector<128x128xf32>
      %c0_34 = arith.constant 0 : index
      %c0_35 = arith.constant 0 : index
      %61 = vector.load %arg12[%c0_34, %c0_35] : memref<128x128xf32, #tpu.memory_space<vmem>>, vector<128x128xf32>
      tpu.vector_store %arg12[%c0_34, %c0_35], %60 {strides = array<i32>} : memref<128x128xf32, #tpu.memory_space<vmem>>, vector<128x128xf32>,
    } else {
    }
    %c0 = arith.constant 0 : index
    %c0_1 = arith.constant 0 : index
    %c0_2 = arith.constant 0 : index
    %3 = vector.load %arg2[%c0, %c0_1, %c0_2] : memref<1x128x128xf32, #tpu.memory_space<vmem>>, vector<1x128x128xf32>
    %4 = vector.shape_cast %3 : vector<1x128x128xf32> to vector<128x128xf32>
    %5 = arith.truncf %4 : vector<128x128xf32> to vector<128x128xbf16>
    %c0_3 = arith.constant 0 : index
    %c0_4 = arith.constant 0 : index
    %c0_5 = arith.constant 0 : index
    %6 = vector.load %arg4[%c0_3, %c0_4, %c0_5] : memref<1x128x96xbf16, #tpu.memory_space<vmem>>, vector<1x128x96xbf16>
    %7 = vector.shape_cast %6 : vector<1x128x96xbf16> to vector<128x96xbf16>
    %cst = arith.constant dense<0.000000e+00> : vector<128x96xf32>
    %8 = tpu.matmul %5, %7, %cst {dimension_numbers = #tpu.dot_dimension_numbers<[1], [0], [0], [1], [0, 0, 1, 1], [], []>} : vector<128x128xbf16>, vector<128x96xbf16>, vector<128x96xf32> -> vector<128x96xf32>
    %c0_6 = arith.constant 0 : index
    %c0_7 = arith.constant 0 : index
    %9 = vector.load %arg3[%c0_6, %c0_7] : memref<128x128xbf16, #tpu.memory_space<vmem>>, vector<128x128xbf16>
    %c0_8 = arith.constant 0 : index
    %c0_9 = arith.constant 0 : index
    %c0_10 = arith.constant 0 : index
    %10 = vector.load %arg5[%c0_8, %c0_9, %c0_10] : memref<1x128x32xbf16, #tpu.memory_space<vmem>>, vector<1x128x32xbf16>
    %11 = vector.shape_cast %10 : vector<1x128x32xbf16> to vector<128x32xbf16>
    %cst_11 = arith.constant dense<0.000000e+00> : vector<128x32xf32>
    %12 = tpu.matmul %9, %11, %cst_11 {dimension_numbers = #tpu.dot_dimension_numbers<[1], [0], [0], [1], [0, 0, 1, 1], [], []>} : vector<128x128xbf16>, vector<128x32xbf16>, vector<128x32xf32> -> vector<128x32xf32>
    %13 = vector.extract_strided_slice %8 {offsets = [0, 0], sizes = [128, 32], strides = [1, 1]} : vector<128x96xf32> to vector<128x32xf32>
    %14 = vector.extract_strided_slice %8 {offsets = [0, 32], sizes = [128, 32], strides = [1, 1]} : vector<128x96xf32> to vector<128x32xf32>
    %15 = vector.extract_strided_slice %8 {offsets = [0, 64], sizes = [128, 32], strides = [1, 1]} : vector<128x96xf32> to vector<128x32xf32>
    %c0_12 = arith.constant 0 : index
    %c0_13 = arith.constant 0 : index
    %c0_14 = arith.constant 0 : index
    %16 = vector.load %arg6[%c0_12, %c0_13, %c0_14] : memref<1x1x32xf32, #tpu.memory_space<vmem>>, vector<1x1x32xf32>
    %17 = vector.shape_cast %16 : vector<1x1x32xf32> to vector<1x32xf32>
    %18 = vector.broadcast %17 : vector<1x32xf32> to vector<128x32xf32>
    %19 = arith.addf %13, %18 : vector<128x32xf32>
    %20 = arith.truncf %19 : vector<128x32xf32> to vector<128x32xbf16>
    %c0_15 = arith.constant 0 : index
    %c0_16 = arith.constant 0 : index
    %c0_17 = arith.constant 0 : index
    %21 = vector.load %arg7[%c0_15, %c0_16, %c0_17] : memref<1x1x32xf32, #tpu.memory_space<vmem>>, vector<1x1x32xf32>
    %22 = vector.shape_cast %21 : vector<1x1x32xf32> to vector<1x32xf32>
    %23 = vector.broadcast %22 : vector<1x32xf32> to vector<128x32xf32>
    %24 = arith.addf %13, %23 : vector<128x32xf32>
    %25 = arith.truncf %24 : vector<128x32xf32> to vector<128x32xbf16>
    %26 = arith.truncf %14 : vector<128x32xf32> to vector<128x32xbf16>
    %27 = arith.truncf %15 : vector<128x32xf32> to vector<128x32xbf16>
    %28 = arith.truncf %12 : vector<128x32xf32> to vector<128x32xbf16>
    %cst_18 = arith.constant dense<0.000000e+00> : vector<128x128xf32>
    %29 = tpu.matmul %20, %26, %cst_18 {dimension_numbers = #tpu.dot_dimension_numbers<[1], [1], [0], [0], [0, 0, 1, 0], [], []>} : vector<128x32xbf16>, vector<128x32xbf16>, vector<128x128xf32> -> vector<128x128xf32>
    %cst_19 = arith.constant dense<0.000000e+00> : vector<128x128xf32>
    %30 = tpu.matmul %25, %28, %cst_19 {dimension_numbers = #tpu.dot_dimension_numbers<[1], [1], [0], [0], [0, 0, 1, 0], [], []>} : vector<128x32xbf16>, vector<128x32xbf16>, vector<128x128xf32> -> vector<128x128xf32>
    %c1_i32 = arith.constant 1 : i32
    %31 = tpu.dynamic_rotate %30 by %c1_i32 dim 1 {stride = 1 : si32, stride_dimension = 0 : si32} : vector<128x128xf32>, i32 -> vector<128x128xf32>
    %32 = tpu.iota {dimensions = array<i32: 0>} : vector<128x128xi32>
    %33 = tpu.iota {dimensions = array<i32: 1>} : vector<128x128xi32>
    %34 = arith.cmpi sgt, %33, %32 : vector<128x128xi32>
    %35 = arith.addf %29, %31 : vector<128x128xf32>
    %cst_20 = arith.constant -1.000000e+30 : f32
    %36 = vector.broadcast %cst_20 : f32 to vector<128x128xf32>
    %37 = arith.select %34, %36, %35 : vector<128x128xi1>, vector<128x128xf32>
    %cst_21 = arith.constant dense<0xFF800000> : vector<128xf32>
    %38 = vector.multi_reduction <maximumf>, %37, %cst_21 [1] : vector<128x128xf32> to vector<128xf32>
    %39 = vector.shape_cast %38 : vector<128xf32> to vector<128x1xf32>
    %40 = vector.broadcast %39 : vector<128x1xf32> to vector<128x128xf32>
    %41 = arith.subf %37, %40 : vector<128x128xf32>
    %42 = math.exp %41 : vector<128x128xf32>
    %cst_22 = arith.constant dense<0.000000e+00> : vector<128xf32>
    %43 = vector.multi_reduction <add>, %42, %cst_22 [1] : vector<128x128xf32> to vector<128xf32>
    %44 = vector.shape_cast %43 : vector<128xf32> to vector<128x1xf32>
    %45 = tpu.reciprocal %44 {approx = true} : vector<128x1xf32> -> vector<128x1xf32>
    %46 = vector.broadcast %45 : vector<128x1xf32> to vector<128x128xf32>
    %47 = arith.mulf %42, %46 : vector<128x128xf32>
    %48 = arith.truncf %47 : vector<128x128xf32> to vector<128x128xbf16>
    %cst_23 = arith.constant dense<0.000000e+00> : vector<128x32xf32>
    %49 = tpu.matmul %48, %27, %cst_23 {dimension_numbers = #tpu.dot_dimension_numbers<[1], [0], [0], [1], [0, 0, 1, 1], [], []>} : vector<128x128xbf16>, vector<128x32xbf16>, vector<128x32xf32> -> vector<128x32xf32>
    %c0_24 = arith.constant 0 : index
    %c0_25 = arith.constant 0 : index
    %50 = vector.load %arg12[%c0_24, %c0_25] : memref<128x128xf32, #tpu.memory_space<vmem>>, vector<128x128xf32>
    %51 = arith.truncf %49 : vector<128x32xf32> to vector<128x32xbf16>
    %c0_26 = arith.constant 0 : index
    %c0_27 = arith.constant 0 : index
    %c0_28 = arith.constant 0 : index
    %52 = vector.load %arg8[%c0_26, %c0_27, %c0_28] : memref<1x32x128xbf16, #tpu.memory_space<vmem>>, vector<1x32x128xbf16>
    %53 = vector.shape_cast %52 : vector<1x32x128xbf16> to vector<32x128xbf16>
    %cst_29 = arith.constant dense<0.000000e+00> : vector<128x128xf32>
    %54 = tpu.matmul %51, %53, %cst_29 {dimension_numbers = #tpu.dot_dimension_numbers<[1], [0], [0], [1], [0, 0, 1, 1], [], []>} : vector<128x32xbf16>, vector<32x128xbf16>, vector<128x128xf32> -> vector<128x128xf32>
    %55 = arith.addf %50, %54 : vector<128x128xf32>
    %c0_30 = arith.constant 0 : index
    %c0_31 = arith.constant 0 : index
    %56 = vector.load %arg12[%c0_30, %c0_31] : memref<128x128xf32, #tpu.memory_space<vmem>>, vector<128x128xf32>
    tpu.vector_store %arg12[%c0_30, %c0_31], %55 {strides = array<i32>} : memref<128x128xf32, #tpu.memory_space<vmem>>, vector<128x128xf32>,
    %c3_i32 = arith.constant 3 : i32
    %57 = arith.cmpi eq, %arg1, %c3_i32 : i32
    %58 = arith.extui %57 : i1 to i32
    %c0_i32_32 = arith.constant 0 : i32
    %59 = arith.cmpi ne, %58, %c0_i32_32 : i32
    scf.if %59 {
      %c0_33 = arith.constant 0 : index
      %c0_34 = arith.constant 0 : index
      %c0_35 = arith.constant 0 : index
      %60 = vector.load %arg2[%c0_33, %c0_34, %c0_35] : memref<1x128x128xf32, #tpu.memory_space<vmem>>, vector<1x128x128xf32>
      %61 = vector.shape_cast %60 : vector<1x128x128xf32> to vector<128x128xf32>
      %c0_36 = arith.constant 0 : index
      %c0_37 = arith.constant 0 : index
      %62 = vector.load %arg12[%c0_36, %c0_37] : memref<128x128xf32, #tpu.memory_space<vmem>>, vector<128x128xf32>
      %63 = arith.addf %61, %62 : vector<128x128xf32>
      %cst_38 = arith.constant dense<0.000000e+00> : vector<128xf32>
      %64 = vector.multi_reduction <add>, %63, %cst_38 [1] : vector<128x128xf32> to vector<128xf32>
      %65 = vector.shape_cast %64 : vector<128xf32> to vector<128x1xf32>
      %cst_39 = arith.constant 1.280000e+02 : f32
      %66 = vector.broadcast %cst_39 : f32 to vector<128x1xf32>
      %67 = arith.divf %65, %66 : vector<128x1xf32>
      %68 = vector.broadcast %67 : vector<128x1xf32> to vector<128x128xf32>
      %69 = arith.subf %63, %68 : vector<128x128xf32>
      %70 = arith.mulf %69, %69 : vector<128x128xf32>
      %cst_40 = arith.constant dense<0.000000e+00> : vector<128xf32>
      %71 = vector.multi_reduction <add>, %70, %cst_40 [1] : vector<128x128xf32> to vector<128xf32>
      %72 = vector.shape_cast %71 : vector<128xf32> to vector<128x1xf32>
      %cst_41 = arith.constant 1.280000e+02 : f32
      %73 = vector.broadcast %cst_41 : f32 to vector<128x1xf32>
      %74 = arith.divf %72, %73 : vector<128x1xf32>
      %75 = vector.broadcast %67 : vector<128x1xf32> to vector<128x128xf32>
      %76 = arith.subf %63, %75 : vector<128x128xf32>
      %cst_42 = arith.constant 9.99999974E-6 : f32
      %77 = vector.broadcast %cst_42 : f32 to vector<128x1xf32>
      %78 = arith.addf %74, %77 : vector<128x1xf32>
      %79 = math.rsqrt %78 : vector<128x1xf32>
      %80 = vector.broadcast %79 : vector<128x1xf32> to vector<128x128xf32>
      %81 = arith.mulf %76, %80 : vector<128x128xf32>
      %c0_43 = arith.constant 0 : index
      %c0_44 = arith.constant 0 : index
      %82 = vector.load %arg9[%c0_43, %c0_44] : memref<1x128xf32, #tpu.memory_space<vmem>>, vector<1x128xf32>
      %83 = vector.broadcast %82 : vector<1x128xf32> to vector<128x128xf32>
      %84 = arith.mulf %81, %83 : vector<128x128xf32>
      %c0_45 = arith.constant 0 : index
      %c0_46 = arith.constant 0 : index
      %85 = vector.load %arg10[%c0_45, %c0_46] : memref<1x128xf32, #tpu.memory_space<vmem>>, vector<1x128xf32>
      %86 = vector.broadcast %85 : vector<1x128xf32> to vector<128x128xf32>
      %87 = arith.addf %84, %86 : vector<128x128xf32>
      %c0_47 = arith.constant 0 : index
      %c0_48 = arith.constant 0 : index
      %c0_49 = arith.constant 0 : index
      %88 = vector.load %arg11[%c0_47, %c0_48, %c0_49] : memref<1x128x128xf32, #tpu.memory_space<vmem>>, vector<1x128x128xf32>
      %89 = vector.shape_cast %88 : vector<1x128x128xf32> to vector<128x128xf32>
      %90 = vector.shape_cast %87 : vector<128x128xf32> to vector<1x128x128xf32>
      tpu.vector_store %arg11[%c0_47, %c0_48, %c0_49], %90 {strides = array<i32>} : memref<1x128x128xf32, #tpu.memory_space<vmem>>, vector<1x128x128xf32>,
    } else {
    }
    return
  }
  func.func @transform_0(%arg0: i32, %arg1: i32) -> (i32, i32, i32) {
    %c0_i32 = arith.constant 0 : i32
    %c0_i32_0 = arith.constant 0 : i32
    %c0_i32_1 = arith.constant 0 : i32
    return %arg0, %c0_i32, %c0_i32_0 : i32, i32, i32
  }
  func.func @transform_1(%arg0: i32, %arg1: i32) -> (i32, i32) {
    %c0_i32 = arith.constant 0 : i32
    %c0_i32_0 = arith.constant 0 : i32
    %c0_i32_1 = arith.constant 0 : i32
    return %c0_i32, %c0_i32_0 : i32, i32
  }
  func.func @transform_2(%arg0: i32, %arg1: i32) -> (i32, i32, i32) {
    %c0_i32 = arith.constant 0 : i32
    %c0_i32_0 = arith.constant 0 : i32
    %c0_i32_1 = arith.constant 0 : i32
    return %arg1, %c0_i32, %c0_i32_0 : i32, i32, i32
  }
  func.func @transform_3(%arg0: i32, %arg1: i32) -> (i32, i32, i32) {
    %c0_i32 = arith.constant 0 : i32
    %c0_i32_0 = arith.constant 0 : i32
    %c0_i32_1 = arith.constant 0 : i32
    return %arg1, %c0_i32, %c0_i32_0 : i32, i32, i32
  }
  func.func @transform_4(%arg0: i32, %arg1: i32) -> (i32, i32, i32) {
    %c0_i32 = arith.constant 0 : i32
    %c0_i32_0 = arith.constant 0 : i32
    %c0_i32_1 = arith.constant 0 : i32
    return %arg1, %c0_i32, %c0_i32_0 : i32, i32, i32
  }
  func.func @transform_5(%arg0: i32, %arg1: i32) -> (i32, i32, i32) {
    %c0_i32 = arith.constant 0 : i32
    %c0_i32_0 = arith.constant 0 : i32
    %c0_i32_1 = arith.constant 0 : i32
    return %arg1, %c0_i32, %c0_i32_0 : i32, i32, i32
  }
  func.func @transform_6(%arg0: i32, %arg1: i32) -> (i32, i32, i32) {
    %c0_i32 = arith.constant 0 : i32
    %c0_i32_0 = arith.constant 0 : i32
    %c0_i32_1 = arith.constant 0 : i32
    return %arg1, %c0_i32, %c0_i32_0 : i32, i32, i32
  }
  func.func @transform_7(%arg0: i32, %arg1: i32) -> (i32, i32) {
    %c0_i32 = arith.constant 0 : i32
    %c0_i32_0 = arith.constant 0 : i32
    %c0_i32_1 = arith.constant 0 : i32
    return %c0_i32, %c0_i32_0 : i32, i32
  }
  func.func @transform_8(%arg0: i32, %arg1: i32) -> (i32, i32) {
    %c0_i32 = arith.constant 0 : i32
    %c0_i32_0 = arith.constant 0 : i32
    %c0_i32_1 = arith.constant 0 : i32
    return %c0_i32, %c0_i32_0 : i32, i32
  }
  func.func @transform_9(%arg0: i32, %arg1: i32) -> (i32, i32, i32) {
    %c0_i32 = arith.constant 0 : i32
    %c0_i32_0 = arith.constant 0 : i32
    %c0_i32_1 = arith.constant 0 : i32
    return %arg0, %c0_i32, %c0_i32_0 : i32, i32, i32
  }
}

</mosaic_0001>

<llo_original>
// kernel: tpu_custom_call.1
$region0: #{tpu_custom_call.1}
  #allocation0 [shape = 'u32[]', space=smem, size = 0x4, offset = 0x4, fixed_abs, tag = 'smem constant byte address 0x4 - core index']
  #allocation1 [shape = 'u32[144,128]{1,0:T(1,128)}', space=vmem, size = 0x12000, scoped, tag = 'internal scratch']
  #allocation2 [shape = 'f32[128,128]{1,0:T(8,128)}', space=vmem, size = 0x10000, scoped, tag = 'scratch operand']
  %s0 = inlined_call_operand.vmem [shape: f32[2,128,128], index: 0, kind: input, shape index: {}]
  %s1 = inlined_call_operand.vmem [shape: bf16[128,128], index: 1, kind: input, shape index: {}]
  %s2 = inlined_call_operand.vmem [shape: bf16[4,128,96], index: 2, kind: input, shape index: {}]
  %s3 = inlined_call_operand.vmem [shape: bf16[4,128,32], index: 3, kind: input, shape index: {}]
  %s4 = inlined_call_operand.vmem [shape: f32[4,1,32], index: 4, kind: input, shape index: {}]
  %s5 = inlined_call_operand.vmem [shape: f32[4,1,32], index: 5, kind: input, shape index: {}]
  %s6 = inlined_call_operand.vmem [shape: bf16[4,32,128], index: 6, kind: input, shape index: {}]
  %s7 = inlined_call_operand.vmem [shape: f32[1,128], index: 7, kind: input, shape index: {}]
  %s8 = inlined_call_operand.vmem [shape: f32[1,128], index: 8, kind: input, shape index: {}]
  %s9 = inlined_call_operand.hbm [shape: f32[2,128,128], index: 9, kind: output, shape index: {}]
  %s10 = sld [smem:[#allocation0]]
  $region77: #{tpu_custom_call.1} parent=0
    _
  %s12 = ssub.s32 1, %s10
  %s13 = scalar_select 0, %s12, %s10
  $region1: #{tpu_custom_call.1} parent=0
    #allocation3 [shape = 'u8[131072]{0}', space=vmem, size = 0x20000, scoped, tag = 'output window, operand 0']
    #allocation4 [shape = 's32[2]{0}', space=sflag, size = 0x8, scoped, tag = 'scoped memory for tpu_custom_call.1']
    %14 = vsyncpa [#allocation4], 0
    %s15 = scalar_lea.sflag [#allocation4], 1
    %16 = vsyncpa %s15, 0
    loop: start=0, step=1, limit=10
    $region2: #{tpu_custom_call.1} parent=1 // loop_pre_header
      _
    $region3: #{tpu_custom_call.1} parent=1 // loop_header
      %s18 = sphi 0, %s22
      %p19 = scmp.ge.s32.totalorder %s18, 10
      %s25 = sphi 0, %s37
      %s26 = sphi 0, %s33
      %s27 = sphi 0, %s25
      %s28 = sphi 0, %s26
      %s29 = sphi 0, %s27
      %s30 = sphi 0, %s28
      %s40 = sphi 0, %s42
      %s43 = sphi 0, %s40
      %s44 = sphi 0, %s43
      %s60 = sphi 0, %s44
      %s64 = sphi 0, %s64
      %s66 = sphi 0, %s64
      %s67 = sphi 0, %s66
      %s81 = sphi 0, %s67
      %s87 = sphi 0, %s89
      %s90 = sphi 0, %s87
      %s91 = sphi 0, %s90
      %s107 = sphi 0, %s91
      %s113 = sphi 0, %s115
      %s116 = sphi 0, %s113
      %s117 = sphi 0, %s116
      %s133 = sphi 0, %s117
      %s139 = sphi 0, %s141
      %s142 = sphi 0, %s139
      %s143 = sphi 0, %s142
      %s159 = sphi 0, %s143
      %s165 = sphi 0, %s167
      %s168 = sphi 0, %s165
      %s169 = sphi 0, %s168
      %s185 = sphi 0, %s169
      %s191 = sphi 0, %s193
      %s194 = sphi 0, %s191
      %s195 = sphi 0, %s194
      %s211 = sphi 0, %s195
      %s215 = sphi 0, %s215
      %s217 = sphi 0, %s215
      %s218 = sphi 0, %s217
      %s232 = sphi 0, %s218
      %s236 = sphi 0, %s236
      %s238 = sphi 0, %s236
      %s239 = sphi 0, %s238
      %s253 = sphi 0, %s239
      %s259 = sphi 0, %s261
      %s262 = sphi 0, %s259
      %s263 = sphi 0, %s262
      %s279 = sphi 0, %s263
    $region4: #{tpu_custom_call.1} parent=1 // loop_header_branch
      %21 = sbr.rel (%p19) target = $region8
    $region5: #{tpu_custom_call.1} parent=1 // loop_body
      %s23 = ssub.s32 %s18, 1
      %s24 = ssub.s32 %s18, 2
      %s31 = sadd.s32 1, %s26
      %p32 = scmp.ge.s32.totalorder %s31, 4
      %s33 = scalar_select %p32, 0, %s31
      %s34 = sadd.s32 1, %s25
      %s35 = scalar_select %p32, %s34, %s25
      %p36 = scmp.ge.s32.totalorder %s35, 2
      %s37 = scalar_select %p36, 0, %s35
      %s38 = ssub.s32 %s25, %s37
      %p39 = scmp.eq.s32.totalorder %s38, 0
      %s41 = sadd.s32 %s40, 1
      %s42 = scalar_select %p39, %s40, %s41
      %p45 = pneg %p39
      %p46 = scmp.eq.s32.totalorder %s18, 7
      %p47 = por %p45, %p46
      %p48 = scmp.ne.s32.totalorder %s40, %s43
      %p49 = scmp.eq.s32.totalorder %s18, 0
      %p50 = por %p48, %p49
      %p51 = scmp.ne.s32.totalorder %s40, %s43
      %p52 = scmp.eq.s32.totalorder %s23, 7
      %p53 = por %p51, %p52
      %p54 = scmp.ne.s32.totalorder %s43, %s44
      %p55 = scmp.eq.s32.totalorder %s23, 0
      %p56 = por %p54, %p55
      %p57 = scmp.ne.s32.totalorder %s43, %s44
      %p58 = scmp.eq.s32.totalorder %s24, 7
      %p59 = por %p57, %p58
      %p61 = scmp.ne.s32.totalorder %s44, %s60
      %p62 = scmp.eq.s32.totalorder %s24, 0
      %p63 = por %p61, %p62
      %s65 = sadd.s32 %s64, 1
      %p68 = scmp.eq.s32.totalorder %s18, 7
      %p69 = scmp.ne.s32.totalorder %s64, %s66
      %p70 = scmp.eq.s32.totalorder %s18, 0
      %p71 = por %p69, %p70
      %p72 = scmp.ne.s32.totalorder %s64, %s66
      %p73 = scmp.eq.s32.totalorder %s23, 7
      %p74 = por %p72, %p73
      %p75 = scmp.ne.s32.totalorder %s66, %s67
      %p76 = scmp.eq.s32.totalorder %s23, 0
      %p77 = por %p75, %p76
      %p78 = scmp.ne.s32.totalorder %s66, %s67
      %p79 = scmp.eq.s32.totalorder %s24, 7
      %p80 = por %p78, %p79
      %p82 = scmp.ne.s32.totalorder %s67, %s81
      %p83 = scmp.eq.s32.totalorder %s24, 0
      %p84 = por %p82, %p83
      %s85 = ssub.s32 %s26, %s33
      %p86 = scmp.eq.s32.totalorder %s85, 0
      %s88 = sadd.s32 %s87, 1
      %s89 = scalar_select %p86, %s87, %s88
      %p92 = pneg %p86
      %p93 = scmp.eq.s32.totalorder %s18, 7
      %p94 = por %p92, %p93
      %p95 = scmp.ne.s32.totalorder %s87, %s90
      %p96 = scmp.eq.s32.totalorder %s18, 0
      %p97 = por %p95, %p96
      %p98 = scmp.ne.s32.totalorder %s87, %s90
      %p99 = scmp.eq.s32.totalorder %s23, 7
      %p100 = por %p98, %p99
      %p101 = scmp.ne.s32.totalorder %s90, %s91
      %p102 = scmp.eq.s32.totalorder %s23, 0
      %p103 = por %p101, %p102
      %p104 = scmp.ne.s32.totalorder %s90, %s91
      %p105 = scmp.eq.s32.totalorder %s24, 7
      %p106 = por %p104, %p105
      %p108 = scmp.ne.s32.totalorder %s91, %s107
      %p109 = scmp.eq.s32.totalorder %s24, 0
      %p110 = por %p108, %p109
      %s111 = ssub.s32 %s26, %s33
      %p112 = scmp.eq.s32.totalorder %s111, 0
      %s114 = sadd.s32 %s113, 1
      %s115 = scalar_select %p112, %s113, %s114
      %p118 = pneg %p112
      %p119 = scmp.eq.s32.totalorder %s18, 7
      %p120 = por %p118, %p119
      %p121 = scmp.ne.s32.totalorder %s113, %s116
      %p122 = scmp.eq.s32.totalorder %s18, 0
      %p123 = por %p121, %p122
      %p124 = scmp.ne.s32.totalorder %s113, %s116
      %p125 = scmp.eq.s32.totalorder %s23, 7
      %p126 = por %p124, %p125
      %p127 = scmp.ne.s32.totalorder %s116, %s117
      %p128 = scmp.eq.s32.totalorder %s23, 0
      %p129 = por %p127, %p128
      %p130 = scmp.ne.s32.totalorder %s116, %s117
      %p131 = scmp.eq.s32.totalorder %s24, 7
      %p132 = por %p130, %p131
      %p134 = scmp.ne.s32.totalorder %s117, %s133
      %p135 = scmp.eq.s32.totalorder %s24, 0
      %p136 = por %p134, %p135
      %s137 = ssub.s32 %s26, %s33
      %p138 = scmp.eq.s32.totalorder %s137, 0
      %s140 = sadd.s32 %s139, 1
      %s141 = scalar_select %p138, %s139, %s140
      %p144 = pneg %p138
      %p145 = scmp.eq.s32.totalorder %s18, 7
      %p146 = por %p144, %p145
      %p147 = scmp.ne.s32.totalorder %s139, %s142
      %p148 = scmp.eq.s32.totalorder %s18, 0
      %p149 = por %p147, %p148
      %p150 = scmp.ne.s32.totalorder %s139, %s142
      %p151 = scmp.eq.s32.totalorder %s23, 7
      %p152 = por %p150, %p151
      %p153 = scmp.ne.s32.totalorder %s142, %s143
      %p154 = scmp.eq.s32.totalorder %s23, 0
      %p155 = por %p153, %p154
      %p156 = scmp.ne.s32.totalorder %s142, %s143
      %p157 = scmp.eq.s32.totalorder %s24, 7
      %p158 = por %p156, %p157
      %p160 = scmp.ne.s32.totalorder %s143, %s159
      %p161 = scmp.eq.s32.totalorder %s24, 0
      %p162 = por %p160, %p161
      %s163 = ssub.s32 %s26, %s33
      %p164 = scmp.eq.s32.totalorder %s163, 0
      %s166 = sadd.s32 %s165, 1
      %s167 = scalar_select %p164, %s165, %s166
      %p170 = pneg %p164
      %p171 = scmp.eq.s32.totalorder %s18, 7
      %p172 = por %p170, %p171
      %p173 = scmp.ne.s32.totalorder %s165, %s168
      %p174 = scmp.eq.s32.totalorder %s18, 0
      %p175 = por %p173, %p174
      %p176 = scmp.ne.s32.totalorder %s165, %s168
      %p177 = scmp.eq.s32.totalorder %s23, 7
      %p178 = por %p176, %p177
      %p179 = scmp.ne.s32.totalorder %s168, %s169
      %p180 = scmp.eq.s32.totalorder %s23, 0
      %p181 = por %p179, %p180
      %p182 = scmp.ne.s32.totalorder %s168, %s169
      %p183 = scmp.eq.s32.totalorder %s24, 7
      %p184 = por %p182, %p183
      %p186 = scmp.ne.s32.totalorder %s169, %s185
      %p187 = scmp.eq.s32.totalorder %s24, 0
      %p188 = por %p186, %p187
      %s189 = ssub.s32 %s26, %s33
      %p190 = scmp.eq.s32.totalorder %s189, 0
      %s192 = sadd.s32 %s191, 1
      %s193 = scalar_select %p190, %s191, %s192
      %p196 = pneg %p190
      %p197 = scmp.eq.s32.totalorder %s18, 7
      %p198 = por %p196, %p197
      %p199 = scmp.ne.s32.totalorder %s191, %s194
      %p200 = scmp.eq.s32.totalorder %s18, 0
      %p201 = por %p199, %p200
      %p202 = scmp.ne.s32.totalorder %s191, %s194
      %p203 = scmp.eq.s32.totalorder %s23, 7
      %p204 = por %p202, %p203
      %p205 = scmp.ne.s32.totalorder %s194, %s195
      %p206 = scmp.eq.s32.totalorder %s23, 0
      %p207 = por %p205, %p206
      %p208 = scmp.ne.s32.totalorder %s194, %s195
      %p209 = scmp.eq.s32.totalorder %s24, 7
      %p210 = por %p208, %p209
      %p212 = scmp.ne.s32.totalorder %s195, %s211
      %p213 = scmp.eq.s32.totalorder %s24, 0
      %p214 = por %p212, %p213
      %s216 = sadd.s32 %s215, 1
      %p219 = scmp.eq.s32.totalorder %s18, 7
      %p220 = scmp.ne.s32.totalorder %s215, %s217
      %p221 = scmp.eq.s32.totalorder %s18, 0
      %p222 = por %p220, %p221
      %p223 = scmp.ne.s32.totalorder %s215, %s217
      %p224 = scmp.eq.s32.totalorder %s23, 7
      %p225 = por %p223, %p224
      %p226 = scmp.ne.s32.totalorder %s217, %s218
      %p227 = scmp.eq.s32.totalorder %s23, 0
      %p228 = por %p226, %p227
      %p229 = scmp.ne.s32.totalorder %s217, %s218
      %p230 = scmp.eq.s32.totalorder %s24, 7
      %p231 = por %p229, %p230
      %p233 = scmp.ne.s32.totalorder %s218, %s232
      %p234 = scmp.eq.s32.totalorder %s24, 0
      %p235 = por %p233, %p234
      %s237 = sadd.s32 %s236, 1
      %p240 = scmp.eq.s32.totalorder %s18, 7
      %p241 = scmp.ne.s32.totalorder %s236, %s238
      %p242 = scmp.eq.s32.totalorder %s18, 0
      %p243 = por %p241, %p242
      %p244 = scmp.ne.s32.totalorder %s236, %s238
      %p245 = scmp.eq.s32.totalorder %s23, 7
      %p246 = por %p244, %p245
      %p247 = scmp.ne.s32.totalorder %s238, %s239
      %p248 = scmp.eq.s32.totalorder %s23, 0
      %p249 = por %p247, %p248
      %p250 = scmp.ne.s32.totalorder %s238, %s239
      %p251 = scmp.eq.s32.totalorder %s24, 7
      %p252 = por %p250, %p251
      %p254 = scmp.ne.s32.totalorder %s239, %s253
      %p255 = scmp.eq.s32.totalorder %s24, 0
      %p256 = por %p254, %p255
      %s257 = ssub.s32 %s25, %s37
      %p258 = scmp.eq.s32.totalorder %s257, 0
      %s260 = sadd.s32 %s259, 1
      %s261 = scalar_select %p258, %s259, %s260
      %p264 = pneg %p258
      %p265 = scmp.eq.s32.totalorder %s18, 7
      %p266 = por %p264, %p265
      %p267 = scmp.ne.s32.totalorder %s259, %s262
      %p268 = scmp.eq.s32.totalorder %s18, 0
      %p269 = por %p267, %p268
      %p270 = scmp.ne.s32.totalorder %s259, %s262
      %p271 = scmp.eq.s32.totalorder %s23, 7
      %p272 = por %p270, %p271
      %p273 = scmp.ne.s32.totalorder %s262, %s263
      %p274 = scmp.eq.s32.totalorder %s23, 0
      %p275 = por %p273, %p274
      %p276 = scmp.ne.s32.totalorder %s262, %s263
      %p277 = scmp.eq.s32.totalorder %s24, 7
      %p278 = por %p276, %p277
      %p280 = scmp.ne.s32.totalorder %s263, %s279
      %p281 = scmp.eq.s32.totalorder %s24, 0
      %p282 = por %p280, %p281
      %p283 = scmp.le.s32.totalorder 1, %s18
      %p284 = scmp.lt.s32.totalorder %s18, 9
      %p285 = pnand %p283, %p284
      %p286 = pneg %p285
      // Predicated region
      $region9: #{tpu_custom_call.1} parent=5 // pred_check
        _
      $region10: #{tpu_custom_call.1} parent=5 // pred_check_branch
        %288 = sbr.rel (%p285) target = $region12
      $region11: #{tpu_custom_call.1} parent=5 // pred_region
        %s289 = ssub.s32 %s18, 1
        // Predicated region
        $region13: #{tpu_custom_call.1} parent=11 // pred_check
          %p290 = pneg %p77
        $region14: #{tpu_custom_call.1} parent=11 // pred_check_branch
          %292 = sbr.rel (%p290) target = $region16
        $region15: #{tpu_custom_call.1} parent=11 // pred_region
          _
        $region16: #{tpu_custom_call.1} parent=11 // pred_fallthru
          _
        // Predicated region
        $region17: #{tpu_custom_call.1} parent=11 // pred_check
          %p293 = pneg %p228
        $region18: #{tpu_custom_call.1} parent=11 // pred_check_branch
          %295 = sbr.rel (%p293) target = $region20
        $region19: #{tpu_custom_call.1} parent=11 // pred_region
          _
        $region20: #{tpu_custom_call.1} parent=11 // pred_fallthru
          _
        // Predicated region
        $region21: #{tpu_custom_call.1} parent=11 // pred_check
          %p296 = pneg %p249
        $region22: #{tpu_custom_call.1} parent=11 // pred_check_branch
          %298 = sbr.rel (%p296) target = $region24
        $region23: #{tpu_custom_call.1} parent=11 // pred_region
          _
        $region24: #{tpu_custom_call.1} parent=11 // pred_fallthru
          _
      $region12: #{tpu_custom_call.1} parent=5 // pred_fallthru
        _
      %p299 = scmp.lt.s32.totalorder %s18, 8
      // Predicated region
      $region25: #{tpu_custom_call.1} parent=5 // pred_check
        %p300 = pneg %p299
      $region26: #{tpu_custom_call.1} parent=5 // pred_check_branch
        %302 = sbr.rel (%p300) target = $region28
      $region27: #{tpu_custom_call.1} parent=5 // pred_region
        // Predicated region
        $region29: #{tpu_custom_call.1} parent=27 // pred_check
          %p303 = pneg %p50
        $region30: #{tpu_custom_call.1} parent=27 // pred_check_branch
          %305 = sbr.rel (%p303) target = $region32
        $region31: #{tpu_custom_call.1} parent=27 // pred_region
          %p306 = scmp.lt.s32.totalorder %s25, 1
          %s307 = scalar_select %p306, %s25, 1
          %s308 = smul.addr %s307, 16
          %s309 = smul.addr %s308, 8
          %s310 = scalar_lea.vmem %s0, %s309
        $region32: #{tpu_custom_call.1} parent=27 // pred_fallthru
          _
        // Predicated region
        $region33: #{tpu_custom_call.1} parent=27 // pred_check
          %p311 = pneg %p97
        $region34: #{tpu_custom_call.1} parent=27 // pred_check_branch
          %313 = sbr.rel (%p311) target = $region36
        $region35: #{tpu_custom_call.1} parent=27 // pred_region
          %p314 = scmp.lt.s32.totalorder %s26, 3
          %s315 = scalar_select %p314, %s26, 3
          %s316 = smul.addr %s315, 16
          %s317 = smul.addr %s316, 4
          %s318 = scalar_lea.vmem %s2, %s317
        $region36: #{tpu_custom_call.1} parent=27 // pred_fallthru
          _
        // Predicated region
        $region37: #{tpu_custom_call.1} parent=27 // pred_check
          %p319 = pneg %p123
        $region38: #{tpu_custom_call.1} parent=27 // pred_check_branch
          %321 = sbr.rel (%p319) target = $region40
        $region39: #{tpu_custom_call.1} parent=27 // pred_region
          %p322 = scmp.lt.s32.totalorder %s26, 3
          %s323 = scalar_select %p322, %s26, 3
          %s324 = smul.addr %s323, 16
          %s325 = smul.addr %s324, 4
          %s326 = scalar_lea.vmem %s3, %s325
        $region40: #{tpu_custom_call.1} parent=27 // pred_fallthru
          _
        // Predicated region
        $region41: #{tpu_custom_call.1} parent=27 // pred_check
          %p327 = pneg %p149
        $region42: #{tpu_custom_call.1} parent=27 // pred_check_branch
          %329 = sbr.rel (%p327) target = $region44
        $region43: #{tpu_custom_call.1} parent=27 // pred_region
          %p330 = scmp.lt.s32.totalorder %s26, 3
          %s331 = scalar_select %p330, %s26, 3
          %s332 = scalar_lea.vmem %s4, %s331
        $region44: #{tpu_custom_call.1} parent=27 // pred_fallthru
          _
        // Predicated region
        $region45: #{tpu_custom_call.1} parent=27 // pred_check
          %p333 = pneg %p175
        $region46: #{tpu_custom_call.1} parent=27 // pred_check_branch
          %335 = sbr.rel (%p333) target = $region48
        $region47: #{tpu_custom_call.1} parent=27 // pred_region
          %p336 = scmp.lt.s32.totalorder %s26, 3
          %s337 = scalar_select %p336, %s26, 3
          %s338 = scalar_lea.vmem %s5, %s337
        $region48: #{tpu_custom_call.1} parent=27 // pred_fallthru
          _
        // Predicated region
        $region49: #{tpu_custom_call.1} parent=27 // pred_check
          %p339 = pneg %p201
        $region50: #{tpu_custom_call.1} parent=27 // pred_check_branch
          %341 = sbr.rel (%p339) target = $region52
        $region51: #{tpu_custom_call.1} parent=27 // pred_region
          %p342 = scmp.lt.s32.totalorder %s26, 3
          %s343 = scalar_select %p342, %s26, 3
          %s344 = smul.addr %s343, 4
          %s345 = smul.addr %s344, 4
          %s346 = scalar_lea.vmem %s6, %s345
        $region52: #{tpu_custom_call.1} parent=27 // pred_fallthru
          _
      $region28: #{tpu_custom_call.1} parent=5 // pred_fallthru
        _
      %p347 = scmp.le.s32.totalorder 1, %s18
      %p348 = scmp.lt.s32.totalorder %s18, 9
      %p349 = pnand %p347, %p348
      %p350 = pneg %p349
      // Predicated region
      $region53: #{tpu_custom_call.1} parent=5 // pred_check
        _
      $region54: #{tpu_custom_call.1} parent=5 // pred_check_branch
        %352 = sbr.rel (%p349) target = $region56
      $region55: #{tpu_custom_call.1} parent=5 // pred_region
        %s353 = ssub.s32 %s18, 1
        %p354 = scmp.lt.s32.totalorder %s27, 1
        %s355 = scalar_select %p354, %s27, 1
        %s356 = smul.addr %s355, 16
        %s357 = smul.addr %s356, 8
        %s358 = scalar_lea.vmem %s0, %s357
        %p359 = pneg %p56
        %p360 = pneg %p53
        %p361 = pneg %p77
        %p362 = pneg %p74
        %p363 = scmp.lt.s32.totalorder %s28, 3
        %s364 = scalar_select %p363, %s28, 3
        %s365 = smul.addr %s364, 16
        %s366 = smul.addr %s365, 4
        %s367 = scalar_lea.vmem %s2, %s366
        %p368 = pneg %p103
        %p369 = pneg %p100
        %p370 = scmp.lt.s32.totalorder %s28, 3
        %s371 = scalar_select %p370, %s28, 3
        %s372 = smul.addr %s371, 16
        %s373 = smul.addr %s372, 4
        %s374 = scalar_lea.vmem %s3, %s373
        %p375 = pneg %p129
        %p376 = pneg %p126
        %p377 = scmp.lt.s32.totalorder %s28, 3
        %s378 = scalar_select %p377, %s28, 3
        %s379 = scalar_lea.vmem %s4, %s378
        %p380 = pneg %p155
        %p381 = pneg %p152
        %p382 = scmp.lt.s32.totalorder %s28, 3
        %s383 = scalar_select %p382, %s28, 3
        %s384 = scalar_lea.vmem %s5, %s383
        %p385 = pneg %p181
        %p386 = pneg %p178
        %p387 = scmp.lt.s32.totalorder %s28, 3
        %s388 = scalar_select %p387, %s28, 3
        %s389 = smul.addr %s388, 4
        %s390 = smul.addr %s389, 4
        %s391 = scalar_lea.vmem %s6, %s390
        %p392 = pneg %p207
        %p393 = pneg %p204
        %p394 = pneg %p228
        %p395 = pneg %p225
        %p396 = pneg %p249
        %p397 = pneg %p246
        %p398 = pneg %p275
        %p399 = pneg %p272
        %s400 = sand.u32 %s262, 1
        %s401 = scalar_lea.sflag [#allocation4], %s400
        %s402 = sand.u32 %s262, 1
        %s403 = smul.addr %s402, 128
        %s404 = scalar_lea.vmem [#allocation3], %s403
        %p405 = scmp.lt.s32.totalorder %s27, 1
        %s406 = scalar_select %p405, %s27, 1
        %s407 = smul.addr %s406, 16
        %s408 = smul.addr %s407, 8
        %s409 = scalar_lea.vmem %s0, %s408
        %p410 = scmp.lt.s32.totalorder %s28, 3
        %s411 = scalar_select %p410, %s28, 3
        %s412 = smul.addr %s411, 16
        %s413 = smul.addr %s412, 4
        %s414 = scalar_lea.vmem %s2, %s413
        %p415 = scmp.lt.s32.totalorder %s28, 3
        %s416 = scalar_select %p415, %s28, 3
        %s417 = smul.addr %s416, 16
        %s418 = smul.addr %s417, 4
        %s419 = scalar_lea.vmem %s3, %s418
        %p420 = scmp.lt.s32.totalorder %s28, 3
        %s421 = scalar_select %p420, %s28, 3
        %s422 = scalar_lea.vmem %s4, %s421
        %p423 = scmp.lt.s32.totalorder %s28, 3
        %s424 = scalar_select %p423, %s28, 3
        %s425 = scalar_lea.vmem %s5, %s424
        %p426 = scmp.lt.s32.totalorder %s28, 3
        %s427 = scalar_select %p426, %s28, 3
        %s428 = smul.addr %s427, 4
        %s429 = smul.addr %s428, 4
        %s430 = scalar_lea.vmem %s6, %s429
        %p432 = scmp.eq.s32.totalorder %s28, 0
        // Predicated region
        $region57: #{tpu_custom_call.1} parent=55 // pred_check
          %p433 = pneg %p432
        $region58: #{tpu_custom_call.1} parent=55 // pred_check_branch
          %435 = sbr.rel (%p433) target = $region60
        $region59: #{tpu_custom_call.1} parent=55 // pred_region
          %436 = vst [vmem:[#allocation2] sm:$0xff] 0.0
          %437 = vst [vmem:[#allocation2 + $0x8] sm:$0xff] 0.0
          %438 = vst [vmem:[#allocation2 + $0x10] sm:$0xff] 0.0
          %439 = vst [vmem:[#allocation2 + $0x18] sm:$0xff] 0.0
          %440 = vst [vmem:[#allocation2 + $0x20] sm:$0xff] 0.0
          %441 = vst [vmem:[#allocation2 + $0x28] sm:$0xff] 0.0
          %442 = vst [vmem:[#allocation2 + $0x30] sm:$0xff] 0.0
          %443 = vst [vmem:[#allocation2 + $0x38] sm:$0xff] 0.0
          %444 = vst [vmem:[#allocation2 + $0x40] sm:$0xff] 0.0
          %445 = vst [vmem:[#allocation2 + $0x48] sm:$0xff] 0.0
          %446 = vst [vmem:[#allocation2 + $0x50] sm:$0xff] 0.0
          %447 = vst [vmem:[#allocation2 + $0x58] sm:$0xff] 0.0
          %448 = vst [vmem:[#allocation2 + $0x60] sm:$0xff] 0.0
          %449 = vst [vmem:[#allocation2 + $0x68] sm:$0xff] 0.0
          %450 = vst [vmem:[#allocation2 + $0x70] sm:$0xff] 0.0
          %451 = vst [vmem:[#allocation2 + $0x78] sm:$0xff] 0.0
        $region60: #{tpu_custom_call.1} parent=55 // pred_fallthru
          _
        %v452 = vld [vmem:[%s409] sm:$0xff]
        %v453 = vld [vmem:[%s409 + $0x8] sm:$0xff]
        %v454 = vld [vmem:[%s409 + $0x10] sm:$0xff]
        %v455 = vld [vmem:[%s409 + $0x18] sm:$0xff]
        %v456 = vld [vmem:[%s409 + $0x20] sm:$0xff]
        %v457 = vld [vmem:[%s409 + $0x28] sm:$0xff]
        %v458 = vld [vmem:[%s409 + $0x30] sm:$0xff]
        %v459 = vld [vmem:[%s409 + $0x38] sm:$0xff]
        %v460 = vld [vmem:[%s409 + $0x40] sm:$0xff]
        %v461 = vld [vmem:[%s409 + $0x48] sm:$0xff]
        %v462 = vld [vmem:[%s409 + $0x50] sm:$0xff]
        %v463 = vld [vmem:[%s409 + $0x58] sm:$0xff]
        %v464 = vld [vmem:[%s409 + $0x60] sm:$0xff]
        %v465 = vld [vmem:[%s409 + $0x68] sm:$0xff]
        %v466 = vld [vmem:[%s409 + $0x70] sm:$0xff]
        %v467 = vld [vmem:[%s409 + $0x78] sm:$0xff]
        %v468 = vpack.c.bf16 %v453, %v452
        %v469 = vpack.c.bf16 %v455, %v454
        %v470 = vpack.c.bf16 %v457, %v456
        %v471 = vpack.c.bf16 %v459, %v458
        %v472 = vpack.c.bf16 %v461, %v460
        %v473 = vpack.c.bf16 %v463, %v462
        %v474 = vpack.c.bf16 %v465, %v464
        %v475 = vpack.c.bf16 %v467, %v466
        %v476 = vld [vmem:[%s414] sm:$0xf]
        %v477 = vld [vmem:[%s414 + $0x4] sm:$0xf]
        %v478 = vld [vmem:[%s414 + $0x8] sm:$0xf]
        %v479 = vld [vmem:[%s414 + $0xc] sm:$0xf]
        %v480 = vld [vmem:[%s414 + $0x10] sm:$0xf]
        %v481 = vld [vmem:[%s414 + $0x14] sm:$0xf]
        %v482 = vld [vmem:[%s414 + $0x18] sm:$0xf]
        %v483 = vld [vmem:[%s414 + $0x1c] sm:$0xf]
        %v484 = vld [vmem:[%s414 + $0x20] sm:$0xf]
        %v485 = vld [vmem:[%s414 + $0x24] sm:$0xf]
        %v486 = vld [vmem:[%s414 + $0x28] sm:$0xf]
        %v487 = vld [vmem:[%s414 + $0x2c] sm:$0xf]
        %v488 = vld [vmem:[%s414 + $0x30] sm:$0xf]
        %v489 = vld [vmem:[%s414 + $0x34] sm:$0xf]
        %v490 = vld [vmem:[%s414 + $0x38] sm:$0xf]
        %v491 = vld [vmem:[%s414 + $0x3c] sm:$0xf]
        %v508 = vunpack.c.l.b16 %v476
        %v509 = vunpack.c.l.b16 %v477
        %v510 = vunpack.c.l.b16 %v478
        %v511 = vunpack.c.l.b16 %v479
        %v512 = vunpack.c.l.b16 %v480
        %v513 = vunpack.c.l.b16 %v481
        %v514 = vunpack.c.l.b16 %v482
        %v515 = vunpack.c.l.b16 %v483
        %v516 = vunpack.c.l.b16 %v484
        %v517 = vunpack.c.l.b16 %v485
        %v518 = vunpack.c.l.b16 %v486
        %v519 = vunpack.c.l.b16 %v487
        %v520 = vunpack.c.l.b16 %v488
        %v521 = vunpack.c.l.b16 %v489
        %v522 = vunpack.c.l.b16 %v490
        %v523 = vunpack.c.l.b16 %v491
        %v524 = vpack.c.b16 %v509, %v508
        %v525 = vpack.c.b16 %v511, %v510
        %v526 = vpack.c.b16 %v513, %v512
        %v527 = vpack.c.b16 %v515, %v514
        %v528 = vpack.c.b16 %v517, %v516
        %v529 = vpack.c.b16 %v519, %v518
        %v530 = vpack.c.b16 %v521, %v520
        %v531 = vpack.c.b16 %v523, %v522
        %540 = vmatprep.subr.bf16.mxu0 0
        %541 = vmatpush1.bf16.msra.mxu0 %v531
        %542 = vmatprep.subr.bf16.mxu0 0
        %543 = vmatpush1.bf16.msra.mxu0 %v530
        %544 = vmatprep.subr.bf16.mxu0 0
        %545 = vmatpush1.bf16.msra.mxu0 %v529
        %546 = vmatprep.subr.bf16.mxu0 0
        %547 = vmatpush1.bf16.msra.mxu0 %v528
        %548 = vmatprep.subr.bf16.mxu0 0
        %549 = vmatpush1.bf16.msra.mxu0 %v527
        %550 = vmatprep.subr.bf16.mxu0 0
        %551 = vmatpush1.bf16.msra.mxu0 %v526
        %552 = vmatprep.subr.bf16.mxu0 0
        %553 = vmatpush1.bf16.msra.mxu0 %v525
        %554 = vmatprep.subr.bf16.mxu0 0
        %555 = vmatpush1.bf16.msra.mxu0 %v524
        %556 = vmatprep.subr.bf16.mxu0 0
        %557 = vmatpush2.bf16.msra.mxu0 0
        %558 = vmatprep.subr.bf16.mxu0 0
        %559 = vmatpush2.bf16.msra.mxu0 0
        %560 = vmatprep.subr.bf16.mxu0 0
        %561 = vmatpush2.bf16.msra.mxu0 0
        %562 = vmatprep.subr.bf16.mxu0 0
        %563 = vmatpush2.bf16.msra.mxu0 0
        %564 = vmatprep.subr.bf16.mxu0 0
        %565 = vmatpush2.bf16.msra.mxu0 0
        %566 = vmatprep.subr.bf16.mxu0 0
        %567 = vmatpush2.bf16.msra.mxu0 0
        %568 = vmatprep.subr.bf16.mxu0 0
        %569 = vmatpush2.bf16.msra.mxu0 0
        %570 = vmatprep.subr.bf16.mxu0 0
        %571 = vmatpush2.bf16.msra.mxu0 0
        %572 = vmatprep.mubr.bf16.mxu0 0
        %573 = vmatmul.mubr.bf16.gmra.mxu0 %v468
        %v574 = vpop.f32.mrf.mxu0
        %v575 = vadd.f32 0.0, %v574
        %v576 = vpop.f32.mrf.mxu0
        %v577 = vpop.f32.mrf.mxu0
        %v578 = vadd.f32 0.0, %v577
        %v579 = vpop.f32.mrf.mxu0
        %580 = vmatprep.mubr.bf16.mxu0 0
        %581 = vmatmul.mubr.bf16.gmra.mxu0 %v469
        %v582 = vpop.f32.mrf.mxu0
        %v583 = vadd.f32 0.0, %v582
        %v584 = vpop.f32.mrf.mxu0
        %v585 = vpop.f32.mrf.mxu0
        %v586 = vadd.f32 0.0, %v585
        %v587 = vpop.f32.mrf.mxu0
        %588 = vmatprep.mubr.bf16.mxu0 0
        %589 = vmatmul.mubr.bf16.gmra.mxu0 %v470
        %v590 = vpop.f32.mrf.mxu0
        %v591 = vadd.f32 0.0, %v590
        %v592 = vpop.f32.mrf.mxu0
        %v593 = vpop.f32.mrf.mxu0
        %v594 = vadd.f32 0.0, %v593
        %v595 = vpop.f32.mrf.mxu0
        %596 = vmatprep.mubr.bf16.mxu0 0
        %597 = vmatmul.mubr.bf16.gmra.mxu0 %v471
        %v598 = vpop.f32.mrf.mxu0
        %v599 = vadd.f32 0.0, %v598
        %v600 = vpop.f32.mrf.mxu0
        %v601 = vpop.f32.mrf.mxu0
        %v602 = vadd.f32 0.0, %v601
        %v603 = vpop.f32.mrf.mxu0
        %604 = vmatprep.mubr.bf16.mxu0 0
        %605 = vmatmul.mubr.bf16.gmra.mxu0 %v472
        %v606 = vpop.f32.mrf.mxu0
        %v607 = vadd.f32 0.0, %v606
        %v608 = vpop.f32.mrf.mxu0
        %v609 = vpop.f32.mrf.mxu0
        %v610 = vadd.f32 0.0, %v609
        %v611 = vpop.f32.mrf.mxu0
        %612 = vmatprep.mubr.bf16.mxu0 0
        %613 = vmatmul.mubr.bf16.gmra.mxu0 %v473
        %v614 = vpop.f32.mrf.mxu0
        %v615 = vadd.f32 0.0, %v614
        %v616 = vpop.f32.mrf.mxu0
        %v617 = vpop.f32.mrf.mxu0
        %v618 = vadd.f32 0.0, %v617
        %v619 = vpop.f32.mrf.mxu0
        %620 = vmatprep.mubr.bf16.mxu0 0
        %621 = vmatmul.mubr.bf16.gmra.mxu0 %v474
        %v622 = vpop.f32.mrf.mxu0
        %v623 = vadd.f32 0.0, %v622
        %v624 = vpop.f32.mrf.mxu0
        %v625 = vpop.f32.mrf.mxu0
        %v626 = vadd.f32 0.0, %v625
        %v627 = vpop.f32.mrf.mxu0
        %628 = vmatprep.mubr.bf16.mxu0 0
        %629 = vmatmul.mubr.bf16.gmra.mxu0 %v475
        %v630 = vpop.f32.mrf.mxu0
        %v631 = vadd.f32 0.0, %v630
        %v632 = vpop.f32.mrf.mxu0
        %v633 = vpop.f32.mrf.mxu0
        %v634 = vadd.f32 0.0, %v633
        %v635 = vpop.f32.mrf.mxu0
        %636 = vdwg.mxu0
        %v637 = vld [vmem:[%s1] sm:$0xf]
        %v638 = vld [vmem:[%s1 + $0x4] sm:$0xf]
        %v639 = vld [vmem:[%s1 + $0x8] sm:$0xf]
        %v640 = vld [vmem:[%s1 + $0xc] sm:$0xf]
        %v641 = vld [vmem:[%s1 + $0x10] sm:$0xf]
        %v642 = vld [vmem:[%s1 + $0x14] sm:$0xf]
        %v643 = vld [vmem:[%s1 + $0x18] sm:$0xf]
        %v644 = vld [vmem:[%s1 + $0x1c] sm:$0xf]
        %v645 = vld [vmem:[%s1 + $0x20] sm:$0xf]
        %v646 = vld [vmem:[%s1 + $0x24] sm:$0xf]
        %v647 = vld [vmem:[%s1 + $0x28] sm:$0xf]
        %v648 = vld [vmem:[%s1 + $0x2c] sm:$0xf]
        %v649 = vld [vmem:[%s1 + $0x30] sm:$0xf]
        %v650 = vld [vmem:[%s1 + $0x34] sm:$0xf]
        %v651 = vld [vmem:[%s1 + $0x38] sm:$0xf]
        %v652 = vld [vmem:[%s1 + $0x3c] sm:$0xf]
        %v653 = vld [vmem:[%s419] sm:$0xf]
        %v654 = vld [vmem:[%s419 + $0x4] sm:$0xf]
        %v655 = vld [vmem:[%s419 + $0x8] sm:$0xf]
        %v656 = vld [vmem:[%s419 + $0xc] sm:$0xf]
        %v657 = vld [vmem:[%s419 + $0x10] sm:$0xf]
        %v658 = vld [vmem:[%s419 + $0x14] sm:$0xf]
        %v659 = vld [vmem:[%s419 + $0x18] sm:$0xf]
        %v660 = vld [vmem:[%s419 + $0x1c] sm:$0xf]
        %v661 = vld [vmem:[%s419 + $0x20] sm:$0xf]
        %v662 = vld [vmem:[%s419 + $0x24] sm:$0xf]
        %v663 = vld [vmem:[%s419 + $0x28] sm:$0xf]
        %v664 = vld [vmem:[%s419 + $0x2c] sm:$0xf]
        %v665 = vld [vmem:[%s419 + $0x30] sm:$0xf]
        %v666 = vld [vmem:[%s419 + $0x34] sm:$0xf]
        %v667 = vld [vmem:[%s419 + $0x38] sm:$0xf]
        %v668 = vld [vmem:[%s419 + $0x3c] sm:$0xf]
        %v685 = vunpack.c.l.b16 %v637
        %v686 = vunpack.c.l.b16 %v638
        %v687 = vunpack.c.l.b16 %v639
        %v688 = vunpack.c.l.b16 %v640
        %v689 = vunpack.c.l.b16 %v641
        %v690 = vunpack.c.l.b16 %v642
        %v691 = vunpack.c.l.b16 %v643
        %v692 = vunpack.c.l.b16 %v644
        %v693 = vunpack.c.l.b16 %v645
        %v694 = vunpack.c.l.b16 %v646
        %v695 = vunpack.c.l.b16 %v647
        %v696 = vunpack.c.l.b16 %v648
        %v697 = vunpack.c.l.b16 %v649
        %v698 = vunpack.c.l.b16 %v650
        %v699 = vunpack.c.l.b16 %v651
        %v700 = vunpack.c.l.b16 %v652
        %v701 = vpack.c.b16 %v686, %v685
        %v702 = vpack.c.b16 %v688, %v687
        %v703 = vpack.c.b16 %v690, %v689
        %v704 = vpack.c.b16 %v692, %v691
        %v705 = vpack.c.b16 %v694, %v693
        %v706 = vpack.c.b16 %v696, %v695
        %v707 = vpack.c.b16 %v698, %v697
        %v708 = vpack.c.b16 %v700, %v699
        %v733 = vunpack.c.l.b16 %v653
        %v734 = vunpack.c.l.b16 %v654
        %v735 = vunpack.c.l.b16 %v655
        %v736 = vunpack.c.l.b16 %v656
        %v737 = vunpack.c.l.b16 %v657
        %v738 = vunpack.c.l.b16 %v658
        %v739 = vunpack.c.l.b16 %v659
        %v740 = vunpack.c.l.b16 %v660
        %v741 = vunpack.c.l.b16 %v661
        %v742 = vunpack.c.l.b16 %v662
        %v743 = vunpack.c.l.b16 %v663
        %v744 = vunpack.c.l.b16 %v664
        %v745 = vunpack.c.l.b16 %v665
        %v746 = vunpack.c.l.b16 %v666
        %v747 = vunpack.c.l.b16 %v667
        %v748 = vunpack.c.l.b16 %v668
        %v749 = vpack.c.b16 %v734, %v733
        %v750 = vpack.c.b16 %v736, %v735
        %v751 = vpack.c.b16 %v738, %v737
        %v752 = vpack.c.b16 %v740, %v739
        %v753 = vpack.c.b16 %v742, %v741
        %v754 = vpack.c.b16 %v744, %v743
        %v755 = vpack.c.b16 %v746, %v745
        %v756 = vpack.c.b16 %v748, %v747
        %765 = vmatprep.subr.bf16.mxu0 0
        %766 = vmatpush1.bf16.msra.mxu0 %v756
        %767 = vmatprep.subr.bf16.mxu0 0
        %768 = vmatpush1.bf16.msra.mxu0 %v755
        %769 = vmatprep.subr.bf16.mxu0 0
        %770 = vmatpush1.bf16.msra.mxu0 %v754
        %771 = vmatprep.subr.bf16.mxu0 0
        %772 = vmatpush1.bf16.msra.mxu0 %v753
        %773 = vmatprep.subr.bf16.mxu0 0
        %774 = vmatpush1.bf16.msra.mxu0 %v752
        %775 = vmatprep.subr.bf16.mxu0 0
        %776 = vmatpush1.bf16.msra.mxu0 %v751
        %777 = vmatprep.subr.bf16.mxu0 0
        %778 = vmatpush1.bf16.msra.mxu0 %v750
        %779 = vmatprep.subr.bf16.mxu0 0
        %780 = vmatpush1.bf16.msra.mxu0 %v749
        %781 = vmatprep.subr.bf16.mxu0 0
        %782 = vmatpush2.bf16.msra.mxu0 0
        %783 = vmatprep.subr.bf16.mxu0 0
        %784 = vmatpush2.bf16.msra.mxu0 0
        %785 = vmatprep.subr.bf16.mxu0 0
        %786 = vmatpush2.bf16.msra.mxu0 0
        %787 = vmatprep.subr.bf16.mxu0 0
        %788 = vmatpush2.bf16.msra.mxu0 0
        %789 = vmatprep.subr.bf16.mxu0 0
        %790 = vmatpush2.bf16.msra.mxu0 0
        %791 = vmatprep.subr.bf16.mxu0 0
        %792 = vmatpush2.bf16.msra.mxu0 0
        %793 = vmatprep.subr.bf16.mxu0 0
        %794 = vmatpush2.bf16.msra.mxu0 0
        %795 = vmatprep.subr.bf16.mxu0 0
        %796 = vmatpush2.bf16.msra.mxu0 0
        %797 = vmatprep.mubr.bf16.mxu0 0
        %798 = vmatmul.mubr.bf16.gmra.mxu0 %v701
        %v799 = vpop.f32.mrf.mxu0
        %v800 = vadd.f32 0.0, %v799
        %v801 = vpop.f32.mrf.mxu0
        %v802 = vpop.f32.mrf.mxu0
        %v803 = vadd.f32 0.0, %v802
        %v804 = vpop.f32.mrf.mxu0
        %805 = vmatprep.mubr.bf16.mxu0 0
        %806 = vmatmul.mubr.bf16.gmra.mxu0 %v702
        %v807 = vpop.f32.mrf.mxu0
        %v808 = vadd.f32 0.0, %v807
        %v809 = vpop.f32.mrf.mxu0
        %v810 = vpop.f32.mrf.mxu0
        %v811 = vadd.f32 0.0, %v810
        %v812 = vpop.f32.mrf.mxu0
        %813 = vmatprep.mubr.bf16.mxu0 0
        %814 = vmatmul.mubr.bf16.gmra.mxu0 %v703
        %v815 = vpop.f32.mrf.mxu0
        %v816 = vadd.f32 0.0, %v815
        %v817 = vpop.f32.mrf.mxu0
        %v818 = vpop.f32.mrf.mxu0
        %v819 = vadd.f32 0.0, %v818
        %v820 = vpop.f32.mrf.mxu0
        %821 = vmatprep.mubr.bf16.mxu0 0
        %822 = vmatmul.mubr.bf16.gmra.mxu0 %v704
        %v823 = vpop.f32.mrf.mxu0
        %v824 = vadd.f32 0.0, %v823
        %v825 = vpop.f32.mrf.mxu0
        %v826 = vpop.f32.mrf.mxu0
        %v827 = vadd.f32 0.0, %v826
        %v828 = vpop.f32.mrf.mxu0
        %829 = vmatprep.mubr.bf16.mxu0 0
        %830 = vmatmul.mubr.bf16.gmra.mxu0 %v705
        %v831 = vpop.f32.mrf.mxu0
        %v832 = vadd.f32 0.0, %v831
        %v833 = vpop.f32.mrf.mxu0
        %v834 = vpop.f32.mrf.mxu0
        %v835 = vadd.f32 0.0, %v834
        %v836 = vpop.f32.mrf.mxu0
        %837 = vmatprep.mubr.bf16.mxu0 0
        %838 = vmatmul.mubr.bf16.gmra.mxu0 %v706
        %v839 = vpop.f32.mrf.mxu0
        %v840 = vadd.f32 0.0, %v839
        %v841 = vpop.f32.mrf.mxu0
        %v842 = vpop.f32.mrf.mxu0
        %v843 = vadd.f32 0.0, %v842
        %v844 = vpop.f32.mrf.mxu0
        %845 = vmatprep.mubr.bf16.mxu0 0
        %846 = vmatmul.mubr.bf16.gmra.mxu0 %v707
        %v847 = vpop.f32.mrf.mxu0
        %v848 = vadd.f32 0.0, %v847
        %v849 = vpop.f32.mrf.mxu0
        %v850 = vpop.f32.mrf.mxu0
        %v851 = vadd.f32 0.0, %v850
        %v852 = vpop.f32.mrf.mxu0
        %853 = vmatprep.mubr.bf16.mxu0 0
        %854 = vmatmul.mubr.bf16.gmra.mxu0 %v708
        %v855 = vpop.f32.mrf.mxu0
        %v856 = vadd.f32 0.0, %v855
        %v857 = vpop.f32.mrf.mxu0
        %v858 = vpop.f32.mrf.mxu0
        %v859 = vadd.f32 0.0, %v858
        %v860 = vpop.f32.mrf.mxu0
        %861 = vdwg.mxu0
        %v862 = vld [vmem:[%s422] sm:$0x1]
        %v864 = vlaneseq
        %v865 = vshrl.u32 %v864, 7
        %v866 = vsub.s32 0, %v865
        %v867 = vrot.slane %v862, %v866
        %v869 = vadd.f32 %v575, %v867
        %v870 = vadd.f32 %v578, %v867
        %v871 = vadd.f32 %v583, %v867
        %v872 = vadd.f32 %v586, %v867
        %v873 = vadd.f32 %v591, %v867
        %v874 = vadd.f32 %v594, %v867
        %v875 = vadd.f32 %v599, %v867
        %v876 = vadd.f32 %v602, %v867
        %v877 = vadd.f32 %v607, %v867
        %v878 = vadd.f32 %v610, %v867
        %v879 = vadd.f32 %v615, %v867
        %v880 = vadd.f32 %v618, %v867
        %v881 = vadd.f32 %v623, %v867
        %v882 = vadd.f32 %v626, %v867
        %v883 = vadd.f32 %v631, %v867
        %v884 = vadd.f32 %v634, %v867
        %v885 = vpack.c.bf16 %v870, %v869
        %v886 = vpack.c.bf16 %v872, %v871
        %v887 = vpack.c.bf16 %v874, %v873
        %v888 = vpack.c.bf16 %v876, %v875
        %v889 = vpack.c.bf16 %v878, %v877
        %v890 = vpack.c.bf16 %v880, %v879
        %v891 = vpack.c.bf16 %v882, %v881
        %v892 = vpack.c.bf16 %v884, %v883
        %v893 = vld [vmem:[%s425] sm:$0x1]
        %v895 = vlaneseq
        %v896 = vshrl.u32 %v895, 7
        %v897 = vsub.s32 0, %v896
        %v898 = vrot.slane %v893, %v897
        %v900 = vadd.f32 %v575, %v898
        %v901 = vadd.f32 %v578, %v898
        %v902 = vadd.f32 %v583, %v898
        %v903 = vadd.f32 %v586, %v898
        %v904 = vadd.f32 %v591, %v898
        %v905 = vadd.f32 %v594, %v898
        %v906 = vadd.f32 %v599, %v898
        %v907 = vadd.f32 %v602, %v898
        %v908 = vadd.f32 %v607, %v898
        %v909 = vadd.f32 %v610, %v898
        %v910 = vadd.f32 %v615, %v898
        %v911 = vadd.f32 %v618, %v898
        %v912 = vadd.f32 %v623, %v898
        %v913 = vadd.f32 %v626, %v898
        %v914 = vadd.f32 %v631, %v898
        %v915 = vadd.f32 %v634, %v898
        %v916 = vpack.c.bf16 %v901, %v900
        %v917 = vpack.c.bf16 %v903, %v902
        %v918 = vpack.c.bf16 %v905, %v904
        %v919 = vpack.c.bf16 %v907, %v906
        %v920 = vpack.c.bf16 %v909, %v908
        %v921 = vpack.c.bf16 %v911, %v910
        %v922 = vpack.c.bf16 %v913, %v912
        %v923 = vpack.c.bf16 %v915, %v914
        %v924 = vpack.c.bf16 %v578, %v575
        %v925 = vpack.c.bf16 %v586, %v583
        %v926 = vpack.c.bf16 %v594, %v591
        %v927 = vpack.c.bf16 %v602, %v599
        %v928 = vpack.c.bf16 %v610, %v607
        %v929 = vpack.c.bf16 %v618, %v615
        %v930 = vpack.c.bf16 %v626, %v623
        %v931 = vpack.c.bf16 %v634, %v631
        %v932 = vpack.c.bf16 %v803, %v800
        %v933 = vpack.c.bf16 %v811, %v808
        %v934 = vpack.c.bf16 %v819, %v816
        %v935 = vpack.c.bf16 %v827, %v824
        %v936 = vpack.c.bf16 %v835, %v832
        %v937 = vpack.c.bf16 %v843, %v840
        %v938 = vpack.c.bf16 %v851, %v848
        %v939 = vpack.c.bf16 %v859, %v856
        %vm940 = vcmask 261120
        %v942 = vsel %vm940, %v916, 0
        %v945 = vsel %vm940, %v917, 0
        %v948 = vsel %vm940, %v918, 0
        %v951 = vsel %vm940, %v919, 0
        %v954 = vsel %vm940, %v920, 0
        %v957 = vsel %vm940, %v921, 0
        %v960 = vsel %vm940, %v922, 0
        %v963 = vsel %vm940, %v923, 0
        %v966 = vsel %vm940, %v932, 0
        %v969 = vsel %vm940, %v933, 0
        %v972 = vsel %vm940, %v934, 0
        %v975 = vsel %vm940, %v935, 0
        %v978 = vsel %vm940, %v936, 0
        %v981 = vsel %vm940, %v937, 0
        %v984 = vsel %vm940, %v938, 0
        %v987 = vsel %vm940, %v939, 0
        %989 = vmatprep.subr.bf16.mxu0 0
        %990 = vmatpush1.bf16.xpose.msra.mxu0 %v987
        %991 = vmatprep.subr.bf16.mxu0 0
        %992 = vmatpush1.bf16.xpose.msra.mxu0 %v984
        %993 = vmatprep.subr.bf16.mxu0 0
        %994 = vmatpush1.bf16.xpose.msra.mxu0 %v981
        %995 = vmatprep.subr.bf16.mxu0 0
        %996 = vmatpush1.bf16.xpose.msra.mxu0 %v978
        %997 = vmatprep.subr.bf16.mxu0 0
        %998 = vmatpush1.bf16.xpose.msra.mxu0 %v975
        %999 = vmatprep.subr.bf16.mxu0 0
        %1000 = vmatpush1.bf16.xpose.msra.mxu0 %v972
        %1001 = vmatprep.subr.bf16.mxu0 0
        %1002 = vmatpush1.bf16.xpose.msra.mxu0 %v969
        %1003 = vmatprep.subr.bf16.mxu0 0
        %1004 = vmatpush1.bf16.xpose.msra.mxu0 %v966
        %1005 = vmatprep.subr.bf16.mxu0 0
        %1006 = vmatpush2.bf16.xpose.msra.mxu0 0
        %1007 = vmatprep.subr.bf16.mxu0 0
        %1008 = vmatpush2.bf16.xpose.msra.mxu0 0
        %1009 = vmatprep.subr.bf16.mxu0 0
        %1010 = vmatpush2.bf16.xpose.msra.mxu0 0
        %1011 = vmatprep.subr.bf16.mxu0 0
        %1012 = vmatpush2.bf16.xpose.msra.mxu0 0
        %1013 = vmatprep.subr.bf16.mxu0 0
        %1014 = vmatpush2.bf16.xpose.msra.mxu0 0
        %1015 = vmatprep.subr.bf16.mxu0 0
        %1016 = vmatpush2.bf16.xpose.msra.mxu0 0
        %1017 = vmatprep.subr.bf16.mxu0 0
        %1018 = vmatpush2.bf16.xpose.msra.mxu0 0
        %1019 = vmatprep.subr.bf16.mxu0 0
        %1020 = vmatpush2.bf16.xpose.msra.mxu0 0
        %1021 = vmatprep.mubr.bf16.mxu0 0
        %1022 = vmatmul.mubr.bf16.gmra.mxu0 %v942
        %v1023 = vpop.f32.mrf.mxu0
        %v1024 = vadd.f32 0.0, %v1023
        %v1025 = vpop.f32.mrf.mxu0
        %v1026 = vpop.f32.mrf.mxu0
        %v1027 = vadd.f32 0.0, %v1026
        %v1028 = vpop.f32.mrf.mxu0
        %1029 = vmatprep.mubr.bf16.mxu0 0
        %1030 = vmatmul.mubr.bf16.gmra.mxu0 %v945
        %v1031 = vpop.f32.mrf.mxu0
        %v1032 = vadd.f32 0.0, %v1031
        %v1033 = vpop.f32.mrf.mxu0
        %v1034 = vpop.f32.mrf.mxu0
        %v1035 = vadd.f32 0.0, %v1034
        %v1036 = vpop.f32.mrf.mxu0
        %1037 = vmatprep.mubr.bf16.mxu0 0
        %1038 = vmatmul.mubr.bf16.gmra.mxu0 %v948
        %v1039 = vpop.f32.mrf.mxu0
        %v1040 = vadd.f32 0.0, %v1039
        %v1041 = vpop.f32.mrf.mxu0
        %v1042 = vpop.f32.mrf.mxu0
        %v1043 = vadd.f32 0.0, %v1042
        %v1044 = vpop.f32.mrf.mxu0
        %1045 = vmatprep.mubr.bf16.mxu0 0
        %1046 = vmatmul.mubr.bf16.gmra.mxu0 %v951
        %v1047 = vpop.f32.mrf.mxu0
        %v1048 = vadd.f32 0.0, %v1047
        %v1049 = vpop.f32.mrf.mxu0
        %v1050 = vpop.f32.mrf.mxu0
        %v1051 = vadd.f32 0.0, %v1050
        %v1052 = vpop.f32.mrf.mxu0
        %1053 = vmatprep.mubr.bf16.mxu0 0
        %1054 = vmatmul.mubr.bf16.gmra.mxu0 %v954
        %v1055 = vpop.f32.mrf.mxu0
        %v1056 = vadd.f32 0.0, %v1055
        %v1057 = vpop.f32.mrf.mxu0
        %v1058 = vpop.f32.mrf.mxu0
        %v1059 = vadd.f32 0.0, %v1058
        %v1060 = vpop.f32.mrf.mxu0
        %1061 = vmatprep.mubr.bf16.mxu0 0
        %1062 = vmatmul.mubr.bf16.gmra.mxu0 %v957
        %v1063 = vpop.f32.mrf.mxu0
        %v1064 = vadd.f32 0.0, %v1063
        %v1065 = vpop.f32.mrf.mxu0
        %v1066 = vpop.f32.mrf.mxu0
        %v1067 = vadd.f32 0.0, %v1066
        %v1068 = vpop.f32.mrf.mxu0
        %1069 = vmatprep.mubr.bf16.mxu0 0
        %1070 = vmatmul.mubr.bf16.gmra.mxu0 %v960
        %v1071 = vpop.f32.mrf.mxu0
        %v1072 = vadd.f32 0.0, %v1071
        %v1073 = vpop.f32.mrf.mxu0
        %v1074 = vpop.f32.mrf.mxu0
        %v1075 = vadd.f32 0.0, %v1074
        %v1076 = vpop.f32.mrf.mxu0
        %1077 = vmatprep.mubr.bf16.mxu0 0
        %1078 = vmatmul.mubr.bf16.gmra.mxu0 %v963
        %v1079 = vpop.f32.mrf.mxu0
        %v1080 = vadd.f32 0.0, %v1079
        %v1081 = vpop.f32.mrf.mxu0
        %v1082 = vpop.f32.mrf.mxu0
        %v1083 = vadd.f32 0.0, %v1082
        %v1084 = vpop.f32.mrf.mxu0
        %1085 = vdwg.mxu0
        %s1087 = sor.u32 256, 1
        %1088 = vrot.lane.b32.xlu0 %v1024, %s1087
        %v1089 = vpop.permute.xlu0 %1088
        %s1091 = sor.u32 256, 9
        %1092 = vrot.lane.b32.xlu0 %v1027, %s1091
        %v1093 = vpop.permute.xlu0 %1092
        %s1095 = sor.u32 256, 17
        %1096 = vrot.lane.b32.xlu0 %v1032, %s1095
        %v1097 = vpop.permute.xlu0 %1096
        %s1099 = sor.u32 256, 25
        %1100 = vrot.lane.b32.xlu0 %v1035, %s1099
        %v1101 = vpop.permute.xlu0 %1100
        %s1103 = sor.u32 256, 33
        %1104 = vrot.lane.b32.xlu0 %v1040, %s1103
        %v1105 = vpop.permute.xlu0 %1104
        %s1107 = sor.u32 256, 41
        %1108 = vrot.lane.b32.xlu0 %v1043, %s1107
        %v1109 = vpop.permute.xlu0 %1108
        %s1111 = sor.u32 256, 49
        %1112 = vrot.lane.b32.xlu0 %v1048, %s1111
        %v1113 = vpop.permute.xlu0 %1112
        %s1115 = sor.u32 256, 57
        %1116 = vrot.lane.b32.xlu0 %v1051, %s1115
        %v1117 = vpop.permute.xlu0 %1116
        %s1119 = sor.u32 256, 65
        %1120 = vrot.lane.b32.xlu0 %v1056, %s1119
        %v1121 = vpop.permute.xlu0 %1120
        %s1123 = sor.u32 256, 73
        %1124 = vrot.lane.b32.xlu0 %v1059, %s1123
        %v1125 = vpop.permute.xlu0 %1124
        %s1127 = sor.u32 256, 81
        %1128 = vrot.lane.b32.xlu0 %v1064, %s1127
        %v1129 = vpop.permute.xlu0 %1128
        %s1131 = sor.u32 256, 89
        %1132 = vrot.lane.b32.xlu0 %v1067, %s1131
        %v1133 = vpop.permute.xlu0 %1132
        %s1135 = sor.u32 256, 97
        %1136 = vrot.lane.b32.xlu0 %v1072, %s1135
        %v1137 = vpop.permute.xlu0 %1136
        %s1139 = sor.u32 256, 105
        %1140 = vrot.lane.b32.xlu0 %v1075, %s1139
        %v1141 = vpop.permute.xlu0 %1140
        %s1143 = sor.u32 256, 113
        %1144 = vrot.lane.b32.xlu0 %v1080, %s1143
        %v1145 = vpop.permute.xlu0 %1144
        %s1147 = sor.u32 256, 121
        %1148 = vrot.lane.b32.xlu0 %v1083, %s1147
        %v1149 = vpop.permute.xlu0 %1148
        %v1150 = vlaneseq
        %v1151 = vshrl.u32 %v1150, 7
        %v1152 = vadd.s32 %v1151, 8
        %v1153 = vadd.s32 %v1151, 16
        %v1154 = vadd.s32 %v1151, 24
        %v1155 = vadd.s32 %v1151, 32
        %v1156 = vadd.s32 %v1151, 40
        %v1157 = vadd.s32 %v1151, 48
        %v1158 = vadd.s32 %v1151, 56
        %v1159 = vadd.s32 %v1151, 64
        %v1160 = vadd.s32 %v1151, 72
        %v1161 = vadd.s32 %v1151, 80
        %v1162 = vadd.s32 %v1151, 88
        %v1163 = vadd.s32 %v1151, 96
        %v1164 = vadd.s32 %v1151, 104
        %v1165 = vadd.s32 %v1151, 112
        %v1166 = vadd.s32 %v1151, 120
        %v1167 = vlaneseq
        %v1168 = vand.u32 %v1167, 127
        %vm1169 = vcmp.gt.s32.totalorder %v1168, %v1151
        %vm1170 = vcmp.gt.s32.totalorder %v1168, %v1152
        %vm1171 = vcmp.gt.s32.totalorder %v1168, %v1153
        %vm1172 = vcmp.gt.s32.totalorder %v1168, %v1154
        %vm1173 = vcmp.gt.s32.totalorder %v1168, %v1155
        %vm1174 = vcmp.gt.s32.totalorder %v1168, %v1156
        %vm1175 = vcmp.gt.s32.totalorder %v1168, %v1157
        %vm1176 = vcmp.gt.s32.totalorder %v1168, %v1158
        %vm1177 = vcmp.gt.s32.totalorder %v1168, %v1159
        %vm1178 = vcmp.gt.s32.totalorder %v1168, %v1160
        %vm1179 = vcmp.gt.s32.totalorder %v1168, %v1161
        %vm1180 = vcmp.gt.s32.totalorder %v1168, %v1162
        %vm1181 = vcmp.gt.s32.totalorder %v1168, %v1163
        %vm1182 = vcmp.gt.s32.totalorder %v1168, %v1164
        %vm1183 = vcmp.gt.s32.totalorder %v1168, %v1165
        %vm1184 = vcmp.gt.s32.totalorder %v1168, %v1166
        %1193 = vrot.lane.b32.xlu0 %v924, 96
        %v1194 = vpop.permute.xlu0 %1193
        %1195 = vrot.lane.b32.xlu0 %v925, 96
        %v1196 = vpop.permute.xlu0 %1195
        %1197 = vrot.lane.b32.xlu0 %v926, 96
        %v1198 = vpop.permute.xlu0 %1197
        %1199 = vrot.lane.b32.xlu0 %v927, 96
        %v1200 = vpop.permute.xlu0 %1199
        %1201 = vrot.lane.b32.xlu0 %v928, 96
        %v1202 = vpop.permute.xlu0 %1201
        %1203 = vrot.lane.b32.xlu0 %v929, 96
        %v1204 = vpop.permute.xlu0 %1203
        %1205 = vrot.lane.b32.xlu0 %v930, 96
        %v1206 = vpop.permute.xlu0 %1205
        %1207 = vrot.lane.b32.xlu0 %v931, 96
        %v1208 = vpop.permute.xlu0 %1207
        %v1210 = vsel %vm940, %v885, 0
        %v1213 = vsel %vm940, %v886, 0
        %v1216 = vsel %vm940, %v887, 0
        %v1219 = vsel %vm940, %v888, 0
        %v1222 = vsel %vm940, %v889, 0
        %v1225 = vsel %vm940, %v890, 0
        %v1228 = vsel %vm940, %v891, 0
        %v1231 = vsel %vm940, %v892, 0
        %v1234 = vsel %vm940, %v1194, 0
        %v1237 = vsel %vm940, %v1196, 0
        %v1240 = vsel %vm940, %v1198, 0
        %v1243 = vsel %vm940, %v1200, 0
        %v1246 = vsel %vm940, %v1202, 0
        %v1249 = vsel %vm940, %v1204, 0
        %v1252 = vsel %vm940, %v1206, 0
        %v1255 = vsel %vm940, %v1208, 0
        %1257 = vmatprep.subr.bf16.mxu0 0
        %1258 = vmatpush1.bf16.xpose.msra.mxu0 %v1255
        %1259 = vmatprep.subr.bf16.mxu0 0
        %1260 = vmatpush1.bf16.xpose.msra.mxu0 %v1252
        %1261 = vmatprep.subr.bf16.mxu0 0
        %1262 = vmatpush1.bf16.xpose.msra.mxu0 %v1249
        %1263 = vmatprep.subr.bf16.mxu0 0
        %1264 = vmatpush1.bf16.xpose.msra.mxu0 %v1246
        %1265 = vmatprep.subr.bf16.mxu0 0
        %1266 = vmatpush1.bf16.xpose.msra.mxu0 %v1243
        %1267 = vmatprep.subr.bf16.mxu0 0
        %1268 = vmatpush1.bf16.xpose.msra.mxu0 %v1240
        %1269 = vmatprep.subr.bf16.mxu0 0
        %1270 = vmatpush1.bf16.xpose.msra.mxu0 %v1237
        %1271 = vmatprep.subr.bf16.mxu0 0
        %1272 = vmatpush1.bf16.xpose.msra.mxu0 %v1234
        %1273 = vmatprep.subr.bf16.mxu0 0
        %1274 = vmatpush2.bf16.xpose.msra.mxu0 0
        %1275 = vmatprep.subr.bf16.mxu0 0
        %1276 = vmatpush2.bf16.xpose.msra.mxu0 0
        %1277 = vmatprep.subr.bf16.mxu0 0
        %1278 = vmatpush2.bf16.xpose.msra.mxu0 0
        %1279 = vmatprep.subr.bf16.mxu0 0
        %1280 = vmatpush2.bf16.xpose.msra.mxu0 0
        %1281 = vmatprep.subr.bf16.mxu0 0
        %1282 = vmatpush2.bf16.xpose.msra.mxu0 0
        %1283 = vmatprep.subr.bf16.mxu0 0
        %1284 = vmatpush2.bf16.xpose.msra.mxu0 0
        %1285 = vmatprep.subr.bf16.mxu0 0
        %1286 = vmatpush2.bf16.xpose.msra.mxu0 0
        %1287 = vmatprep.subr.bf16.mxu0 0
        %1288 = vmatpush2.bf16.xpose.msra.mxu0 0
        %1289 = vmatprep.mubr.bf16.mxu0 0
        %1290 = vmatmul.mubr.bf16.gmra.mxu0 %v1210
        %v1291 = vpop.f32.mrf.mxu0
        %v1292 = vadd.f32 %v1089, %v1291
        %v1293 = vpop.f32.mrf.mxu0
        %v1294 = vpop.f32.mrf.mxu0
        %v1295 = vadd.f32 %v1093, %v1294
        %v1296 = vpop.f32.mrf.mxu0
        %1297 = vmatprep.mubr.bf16.mxu0 0
        %1298 = vmatmul.mubr.bf16.gmra.mxu0 %v1213
        %v1299 = vpop.f32.mrf.mxu0
        %v1300 = vadd.f32 %v1097, %v1299
        %v1301 = vpop.f32.mrf.mxu0
        %v1302 = vpop.f32.mrf.mxu0
        %v1303 = vadd.f32 %v1101, %v1302
        %v1304 = vpop.f32.mrf.mxu0
        %1305 = vmatprep.mubr.bf16.mxu0 0
        %1306 = vmatmul.mubr.bf16.gmra.mxu0 %v1216
        %v1307 = vpop.f32.mrf.mxu0
        %v1308 = vadd.f32 %v1105, %v1307
        %v1309 = vpop.f32.mrf.mxu0
        %v1310 = vpop.f32.mrf.mxu0
        %v1311 = vadd.f32 %v1109, %v1310
        %v1312 = vpop.f32.mrf.mxu0
        %1313 = vmatprep.mubr.bf16.mxu0 0
        %1314 = vmatmul.mubr.bf16.gmra.mxu0 %v1219
        %v1315 = vpop.f32.mrf.mxu0
        %v1316 = vadd.f32 %v1113, %v1315
        %v1317 = vpop.f32.mrf.mxu0
        %v1318 = vpop.f32.mrf.mxu0
        %v1319 = vadd.f32 %v1117, %v1318
        %v1320 = vpop.f32.mrf.mxu0
        %1321 = vmatprep.mubr.bf16.mxu0 0
        %1322 = vmatmul.mubr.bf16.gmra.mxu0 %v1222
        %v1323 = vpop.f32.mrf.mxu0
        %v1324 = vadd.f32 %v1121, %v1323
        %v1325 = vpop.f32.mrf.mxu0
        %v1326 = vpop.f32.mrf.mxu0
        %v1327 = vadd.f32 %v1125, %v1326
        %v1328 = vpop.f32.mrf.mxu0
        %1329 = vmatprep.mubr.bf16.mxu0 0
        %1330 = vmatmul.mubr.bf16.gmra.mxu0 %v1225
        %v1331 = vpop.f32.mrf.mxu0
        %v1332 = vadd.f32 %v1129, %v1331
        %v1333 = vpop.f32.mrf.mxu0
        %v1334 = vpop.f32.mrf.mxu0
        %v1335 = vadd.f32 %v1133, %v1334
        %v1336 = vpop.f32.mrf.mxu0
        %1337 = vmatprep.mubr.bf16.mxu0 0
        %1338 = vmatmul.mubr.bf16.gmra.mxu0 %v1228
        %v1339 = vpop.f32.mrf.mxu0
        %v1340 = vadd.f32 %v1137, %v1339
        %v1341 = vpop.f32.mrf.mxu0
        %v1342 = vpop.f32.mrf.mxu0
        %v1343 = vadd.f32 %v1141, %v1342
        %v1344 = vpop.f32.mrf.mxu0
        %1345 = vmatprep.mubr.bf16.mxu0 0
        %1346 = vmatmul.mubr.bf16.gmra.mxu0 %v1231
        %v1347 = vpop.f32.mrf.mxu0
        %v1348 = vadd.f32 %v1145, %v1347
        %v1349 = vpop.f32.mrf.mxu0
        %v1350 = vpop.f32.mrf.mxu0
        %v1351 = vadd.f32 %v1149, %v1350
        %v1352 = vpop.f32.mrf.mxu0
        %1353 = vdwg.mxu0
        %v1354 = vsel %vm1169, -1e+30, %v1292
        %v1355 = vsel %vm1170, -1e+30, %v1295
        %v1356 = vsel %vm1171, -1e+30, %v1300
        %v1357 = vsel %vm1172, -1e+30, %v1303
        %v1358 = vsel %vm1173, -1e+30, %v1308
        %v1359 = vsel %vm1174, -1e+30, %v1311
        %v1360 = vsel %vm1175, -1e+30, %v1316
        %v1361 = vsel %vm1176, -1e+30, %v1319
        %v1362 = vsel %vm1177, -1e+30, %v1324
        %v1363 = vsel %vm1178, -1e+30, %v1327
        %v1364 = vsel %vm1179, -1e+30, %v1332
        %v1365 = vsel %vm1180, -1e+30, %v1335
        %v1366 = vsel %vm1181, -1e+30, %v1340
        %v1367 = vsel %vm1182, -1e+30, %v1343
        %v1368 = vsel %vm1183, -1e+30, %v1348
        %v1369 = vsel %vm1184, -1e+30, %v1351
        %1370 = vmax.xlane.f32.xlu0 %v1354
        %v1371 = vpop.xlane.xlu0 %1370
        %1372 = vmax.xlane.f32.xlu0 %v1355
        %v1373 = vpop.xlane.xlu0 %1372
        %1374 = vmax.xlane.f32.xlu0 %v1356
        %v1375 = vpop.xlane.xlu0 %1374
        %1376 = vmax.xlane.f32.xlu0 %v1357
        %v1377 = vpop.xlane.xlu0 %1376
        %1378 = vmax.xlane.f32.xlu0 %v1358
        %v1379 = vpop.xlane.xlu0 %1378
        %1380 = vmax.xlane.f32.xlu0 %v1359
        %v1381 = vpop.xlane.xlu0 %1380
        %1382 = vmax.xlane.f32.xlu0 %v1360
        %v1383 = vpop.xlane.xlu0 %1382
        %1384 = vmax.xlane.f32.xlu0 %v1361
        %v1385 = vpop.xlane.xlu0 %1384
        %1386 = vmax.xlane.f32.xlu0 %v1362
        %v1387 = vpop.xlane.xlu0 %1386
        %1388 = vmax.xlane.f32.xlu0 %v1363
        %v1389 = vpop.xlane.xlu0 %1388
        %1390 = vmax.xlane.f32.xlu0 %v1364
        %v1391 = vpop.xlane.xlu0 %1390
        %1392 = vmax.xlane.f32.xlu0 %v1365
        %v1393 = vpop.xlane.xlu0 %1392
        %1394 = vmax.xlane.f32.xlu0 %v1366
        %v1395 = vpop.xlane.xlu0 %1394
        %1396 = vmax.xlane.f32.xlu0 %v1367
        %v1397 = vpop.xlane.xlu0 %1396
        %1398 = vmax.xlane.f32.xlu0 %v1368
        %v1399 = vpop.xlane.xlu0 %1398
        %1400 = vmax.xlane.f32.xlu0 %v1369
        %v1401 = vpop.xlane.xlu0 %1400
        %v1402 = vsub.f32 %v1354, %v1371
        %v1403 = vsub.f32 %v1355, %v1373
        %v1404 = vsub.f32 %v1356, %v1375
        %v1405 = vsub.f32 %v1357, %v1377
        %v1406 = vsub.f32 %v1358, %v1379
        %v1407 = vsub.f32 %v1359, %v1381
        %v1408 = vsub.f32 %v1360, %v1383
        %v1409 = vsub.f32 %v1361, %v1385
        %v1410 = vsub.f32 %v1362, %v1387
        %v1411 = vsub.f32 %v1363, %v1389
        %v1412 = vsub.f32 %v1364, %v1391
        %v1413 = vsub.f32 %v1365, %v1393
        %v1414 = vsub.f32 %v1366, %v1395
        %v1415 = vsub.f32 %v1367, %v1397
        %v1416 = vsub.f32 %v1368, %v1399
        %v1417 = vsub.f32 %v1369, %v1401
        %v1418 = vmul.f32 %v1402, 1.442695
        %v1419 = vpow.pop %v1418
        %v1420 = vmul.f32 %v1403, 1.442695
        %v1421 = vpow.pop %v1420
        %v1422 = vmul.f32 %v1404, 1.442695
        %v1423 = vpow.pop %v1422
        %v1424 = vmul.f32 %v1405, 1.442695
        %v1425 = vpow.pop %v1424
        %v1426 = vmul.f32 %v1406, 1.442695
        %v1427 = vpow.pop %v1426
        %v1428 = vmul.f32 %v1407, 1.442695
        %v1429 = vpow.pop %v1428
        %v1430 = vmul.f32 %v1408, 1.442695
        %v1431 = vpow.pop %v1430
        %v1432 = vmul.f32 %v1409, 1.442695
        %v1433 = vpow.pop %v1432
        %v1434 = vmul.f32 %v1410, 1.442695
        %v1435 = vpow.pop %v1434
        %v1436 = vmul.f32 %v1411, 1.442695
        %v1437 = vpow.pop %v1436
        %v1438 = vmul.f32 %v1412, 1.442695
        %v1439 = vpow.pop %v1438
        %v1440 = vmul.f32 %v1413, 1.442695
        %v1441 = vpow.pop %v1440
        %v1442 = vmul.f32 %v1414, 1.442695
        %v1443 = vpow.pop %v1442
        %v1444 = vmul.f32 %v1415, 1.442695
        %v1445 = vpow.pop %v1444
        %v1446 = vmul.f32 %v1416, 1.442695
        %v1447 = vpow.pop %v1446
        %v1448 = vmul.f32 %v1417, 1.442695
        %v1449 = vpow.pop %v1448
        %1450 = vadd.xlane.f32.xlu0 %v1419
        %v1451 = vpop.xlane.xlu0 %1450
        %1452 = vadd.xlane.f32.xlu0 %v1421
        %v1453 = vpop.xlane.xlu0 %1452
        %1454 = vadd.xlane.f32.xlu0 %v1423
        %v1455 = vpop.xlane.xlu0 %1454
        %1456 = vadd.xlane.f32.xlu0 %v1425
        %v1457 = vpop.xlane.xlu0 %1456
        %1458 = vadd.xlane.f32.xlu0 %v1427
        %v1459 = vpop.xlane.xlu0 %1458
        %1460 = vadd.xlane.f32.xlu0 %v1429
        %v1461 = vpop.xlane.xlu0 %1460
        %1462 = vadd.xlane.f32.xlu0 %v1431
        %v1463 = vpop.xlane.xlu0 %1462
        %1464 = vadd.xlane.f32.xlu0 %v1433
        %v1465 = vpop.xlane.xlu0 %1464
        %1466 = vadd.xlane.f32.xlu0 %v1435
        %v1467 = vpop.xlane.xlu0 %1466
        %1468 = vadd.xlane.f32.xlu0 %v1437
        %v1469 = vpop.xlane.xlu0 %1468
        %1470 = vadd.xlane.f32.xlu0 %v1439
        %v1471 = vpop.xlane.xlu0 %1470
        %1472 = vadd.xlane.f32.xlu0 %v1441
        %v1473 = vpop.xlane.xlu0 %1472
        %1474 = vadd.xlane.f32.xlu0 %v1443
        %v1475 = vpop.xlane.xlu0 %1474
        %1476 = vadd.xlane.f32.xlu0 %v1445
        %v1477 = vpop.xlane.xlu0 %1476
        %1478 = vadd.xlane.f32.xlu0 %v1447
        %v1479 = vpop.xlane.xlu0 %1478
        %1480 = vadd.xlane.f32.xlu0 %v1449
        %v1481 = vpop.xlane.xlu0 %1480
        %v1482 = vrcp.pop %v1451
        %v1483 = vrcp.pop %v1453
        %v1484 = vrcp.pop %v1455
        %v1485 = vrcp.pop %v1457
        %v1486 = vrcp.pop %v1459
        %v1487 = vrcp.pop %v1461
        %v1488 = vrcp.pop %v1463
        %v1489 = vrcp.pop %v1465
        %v1490 = vrcp.pop %v1467
        %v1491 = vrcp.pop %v1469
        %v1492 = vrcp.pop %v1471
        %v1493 = vrcp.pop %v1473
        %v1494 = vrcp.pop %v1475
        %v1495 = vrcp.pop %v1477
        %v1496 = vrcp.pop %v1479
        %v1497 = vrcp.pop %v1481
        %v1498 = vmul.f32 %v1419, %v1482
        %v1499 = vmul.f32 %v1421, %v1483
        %v1500 = vmul.f32 %v1423, %v1484
        %v1501 = vmul.f32 %v1425, %v1485
        %v1502 = vmul.f32 %v1427, %v1486
        %v1503 = vmul.f32 %v1429, %v1487
        %v1504 = vmul.f32 %v1431, %v1488
        %v1505 = vmul.f32 %v1433, %v1489
        %v1506 = vmul.f32 %v1435, %v1490
        %v1507 = vmul.f32 %v1437, %v1491
        %v1508 = vmul.f32 %v1439, %v1492
        %v1509 = vmul.f32 %v1441, %v1493
        %v1510 = vmul.f32 %v1443, %v1494
        %v1511 = vmul.f32 %v1445, %v1495
        %v1512 = vmul.f32 %v1447, %v1496
        %v1513 = vmul.f32 %v1449, %v1497
        %v1514 = vpack.c.bf16 %v1499, %v1498
        %v1515 = vpack.c.bf16 %v1501, %v1500
        %v1516 = vpack.c.bf16 %v1503, %v1502
        %v1517 = vpack.c.bf16 %v1505, %v1504
        %v1518 = vpack.c.bf16 %v1507, %v1506
        %v1519 = vpack.c.bf16 %v1509, %v1508
        %v1520 = vpack.c.bf16 %v1511, %v1510
        %v1521 = vpack.c.bf16 %v1513, %v1512
        %1522 = vrot.lane.b32.xlu0 %v924, 64
        %v1523 = vpop.permute.xlu0 %1522
        %1524 = vrot.lane.b32.xlu0 %v925, 64
        %v1525 = vpop.permute.xlu0 %1524
        %1526 = vrot.lane.b32.xlu0 %v926, 64
        %v1527 = vpop.permute.xlu0 %1526
        %1528 = vrot.lane.b32.xlu0 %v927, 64
        %v1529 = vpop.permute.xlu0 %1528
        %1530 = vrot.lane.b32.xlu0 %v928, 64
        %v1531 = vpop.permute.xlu0 %1530
        %1532 = vrot.lane.b32.xlu0 %v929, 64
        %v1533 = vpop.permute.xlu0 %1532
        %1534 = vrot.lane.b32.xlu0 %v930, 64
        %v1535 = vpop.permute.xlu0 %1534
        %1536 = vrot.lane.b32.xlu0 %v931, 64
        %v1537 = vpop.permute.xlu0 %1536
        %1546 = vmatprep.subr.bf16.mxu0 0
        %1547 = vmatpush1.bf16.msra.mxu0 %v1537
        %1548 = vmatprep.subr.bf16.mxu0 0
        %1549 = vmatpush1.bf16.msra.mxu0 %v1535
        %1550 = vmatprep.subr.bf16.mxu0 0
        %1551 = vmatpush1.bf16.msra.mxu0 %v1533
        %1552 = vmatprep.subr.bf16.mxu0 0
        %1553 = vmatpush1.bf16.msra.mxu0 %v1531
        %1554 = vmatprep.subr.bf16.mxu0 0
        %1555 = vmatpush1.bf16.msra.mxu0 %v1529
        %1556 = vmatprep.subr.bf16.mxu0 0
        %1557 = vmatpush1.bf16.msra.mxu0 %v1527
        %1558 = vmatprep.subr.bf16.mxu0 0
        %1559 = vmatpush1.bf16.msra.mxu0 %v1525
        %1560 = vmatprep.subr.bf16.mxu0 0
        %1561 = vmatpush1.bf16.msra.mxu0 %v1523
        %1562 = vmatprep.subr.bf16.mxu0 0
        %1563 = vmatpush2.bf16.msra.mxu0 0
        %1564 = vmatprep.subr.bf16.mxu0 0
        %1565 = vmatpush2.bf16.msra.mxu0 0
        %1566 = vmatprep.subr.bf16.mxu0 0
        %1567 = vmatpush2.bf16.msra.mxu0 0
        %1568 = vmatprep.subr.bf16.mxu0 0
        %1569 = vmatpush2.bf16.msra.mxu0 0
        %1570 = vmatprep.subr.bf16.mxu0 0
        %1571 = vmatpush2.bf16.msra.mxu0 0
        %1572 = vmatprep.subr.bf16.mxu0 0
        %1573 = vmatpush2.bf16.msra.mxu0 0
        %1574 = vmatprep.subr.bf16.mxu0 0
        %1575 = vmatpush2.bf16.msra.mxu0 0
        %1576 = vmatprep.subr.bf16.mxu0 0
        %1577 = vmatpush2.bf16.msra.mxu0 0
        %1578 = vmatprep.mubr.bf16.mxu0 0
        %1579 = vmatmul.mubr.bf16.gmra.mxu0 %v1514
        %v1580 = vpop.f32.mrf.mxu0
        %v1581 = vadd.f32 0.0, %v1580
        %v1582 = vpop.f32.mrf.mxu0
        %v1583 = vpop.f32.mrf.mxu0
        %v1584 = vadd.f32 0.0, %v1583
        %v1585 = vpop.f32.mrf.mxu0
        %1586 = vmatprep.mubr.bf16.mxu0 0
        %1587 = vmatmul.mubr.bf16.gmra.mxu0 %v1515
        %v1588 = vpop.f32.mrf.mxu0
        %v1589 = vadd.f32 0.0, %v1588
        %v1590 = vpop.f32.mrf.mxu0
        %v1591 = vpop.f32.mrf.mxu0
        %v1592 = vadd.f32 0.0, %v1591
        %v1593 = vpop.f32.mrf.mxu0
        %1594 = vmatprep.mubr.bf16.mxu0 0
        %1595 = vmatmul.mubr.bf16.gmra.mxu0 %v1516
        %v1596 = vpop.f32.mrf.mxu0
        %v1597 = vadd.f32 0.0, %v1596
        %v1598 = vpop.f32.mrf.mxu0
        %v1599 = vpop.f32.mrf.mxu0
        %v1600 = vadd.f32 0.0, %v1599
        %v1601 = vpop.f32.mrf.mxu0
        %1602 = vmatprep.mubr.bf16.mxu0 0
        %1603 = vmatmul.mubr.bf16.gmra.mxu0 %v1517
        %v1604 = vpop.f32.mrf.mxu0
        %v1605 = vadd.f32 0.0, %v1604
        %v1606 = vpop.f32.mrf.mxu0
        %v1607 = vpop.f32.mrf.mxu0
        %v1608 = vadd.f32 0.0, %v1607
        %v1609 = vpop.f32.mrf.mxu0
        %1610 = vmatprep.mubr.bf16.mxu0 0
        %1611 = vmatmul.mubr.bf16.gmra.mxu0 %v1518
        %v1612 = vpop.f32.mrf.mxu0
        %v1613 = vadd.f32 0.0, %v1612
        %v1614 = vpop.f32.mrf.mxu0
        %v1615 = vpop.f32.mrf.mxu0
        %v1616 = vadd.f32 0.0, %v1615
        %v1617 = vpop.f32.mrf.mxu0
        %1618 = vmatprep.mubr.bf16.mxu0 0
        %1619 = vmatmul.mubr.bf16.gmra.mxu0 %v1519
        %v1620 = vpop.f32.mrf.mxu0
        %v1621 = vadd.f32 0.0, %v1620
        %v1622 = vpop.f32.mrf.mxu0
        %v1623 = vpop.f32.mrf.mxu0
        %v1624 = vadd.f32 0.0, %v1623
        %v1625 = vpop.f32.mrf.mxu0
        %1626 = vmatprep.mubr.bf16.mxu0 0
        %1627 = vmatmul.mubr.bf16.gmra.mxu0 %v1520
        %v1628 = vpop.f32.mrf.mxu0
        %v1629 = vadd.f32 0.0, %v1628
        %v1630 = vpop.f32.mrf.mxu0
        %v1631 = vpop.f32.mrf.mxu0
        %v1632 = vadd.f32 0.0, %v1631
        %v1633 = vpop.f32.mrf.mxu0
        %1634 = vmatprep.mubr.bf16.mxu0 0
        %1635 = vmatmul.mubr.bf16.gmra.mxu0 %v1521
        %v1636 = vpop.f32.mrf.mxu0
        %v1637 = vadd.f32 0.0, %v1636
        %v1638 = vpop.f32.mrf.mxu0
        %v1639 = vpop.f32.mrf.mxu0
        %v1640 = vadd.f32 0.0, %v1639
        %v1641 = vpop.f32.mrf.mxu0
        %1642 = vdwg.mxu0
        %v1643 = vld [vmem:[#allocation2] sm:$0xff]
        %v1644 = vld [vmem:[#allocation2 + $0x8] sm:$0xff]
        %v1645 = vld [vmem:[#allocation2 + $0x10] sm:$0xff]
        %v1646 = vld [vmem:[#allocation2 + $0x18] sm:$0xff]
        %v1647 = vld [vmem:[#allocation2 + $0x20] sm:$0xff]
        %v1648 = vld [vmem:[#allocation2 + $0x28] sm:$0xff]
        %v1649 = vld [vmem:[#allocation2 + $0x30] sm:$0xff]
        %v1650 = vld [vmem:[#allocation2 + $0x38] sm:$0xff]
        %v1651 = vld [vmem:[#allocation2 + $0x40] sm:$0xff]
        %v1652 = vld [vmem:[#allocation2 + $0x48] sm:$0xff]
        %v1653 = vld [vmem:[#allocation2 + $0x50] sm:$0xff]
        %v1654 = vld [vmem:[#allocation2 + $0x58] sm:$0xff]
        %v1655 = vld [vmem:[#allocation2 + $0x60] sm:$0xff]
        %v1656 = vld [vmem:[#allocation2 + $0x68] sm:$0xff]
        %v1657 = vld [vmem:[#allocation2 + $0x70] sm:$0xff]
        %v1658 = vld [vmem:[#allocation2 + $0x78] sm:$0xff]
        %v1659 = vpack.c.bf16 %v1584, %v1581
        %v1660 = vpack.c.bf16 %v1592, %v1589
        %v1661 = vpack.c.bf16 %v1600, %v1597
        %v1662 = vpack.c.bf16 %v1608, %v1605
        %v1663 = vpack.c.bf16 %v1616, %v1613
        %v1664 = vpack.c.bf16 %v1624, %v1621
        %v1665 = vpack.c.bf16 %v1632, %v1629
        %v1666 = vpack.c.bf16 %v1640, %v1637
        %v1667 = vld [vmem:[%s430] sm:$0xf]
        %v1668 = vld [vmem:[%s430 + $0x4] sm:$0xf]
        %v1669 = vld [vmem:[%s430 + $0x8] sm:$0xf]
        %v1670 = vld [vmem:[%s430 + $0xc] sm:$0xf]
        %v1675 = vunpack.c.l.b16 %v1667
        %v1676 = vunpack.c.l.b16 %v1668
        %v1677 = vunpack.c.l.b16 %v1669
        %v1678 = vunpack.c.l.b16 %v1670
        %v1679 = vpack.c.b16 %v1676, %v1675
        %v1680 = vpack.c.b16 %v1678, %v1677
        %v1684 = vsel %vm940, %v1659, 0
        %v1687 = vsel %vm940, %v1660, 0
        %v1690 = vsel %vm940, %v1661, 0
        %v1693 = vsel %vm940, %v1662, 0
        %v1696 = vsel %vm940, %v1663, 0
        %v1699 = vsel %vm940, %v1664, 0
        %v1702 = vsel %vm940, %v1665, 0
        %v1705 = vsel %vm940, %v1666, 0
        %1707 = vmatprep.subr.bf16.mxu0 0
        %1708 = vmatpush1.bf16.msra.mxu0 0
        %1709 = vmatprep.subr.bf16.mxu0 0
        %1710 = vmatpush1.bf16.msra.mxu0 0
        %1711 = vmatprep.subr.bf16.mxu0 0
        %1712 = vmatpush1.bf16.msra.mxu0 0
        %1713 = vmatprep.subr.bf16.mxu0 0
        %1714 = vmatpush1.bf16.msra.mxu0 0
        %1715 = vmatprep.subr.bf16.mxu0 0
        %1716 = vmatpush1.bf16.msra.mxu0 0
        %1717 = vmatprep.subr.bf16.mxu0 0
        %1718 = vmatpush1.bf16.msra.mxu0 0
        %1719 = vmatprep.subr.bf16.mxu0 0
        %1720 = vmatpush1.bf16.msra.mxu0 %v1680
        %1721 = vmatprep.subr.bf16.mxu0 0
        %1722 = vmatpush1.bf16.msra.mxu0 %v1679
        %1723 = vmatprep.subr.bf16.mxu0 0
        %1724 = vmatpush2.bf16.msra.mxu0 0
        %1725 = vmatprep.subr.bf16.mxu0 0
        %1726 = vmatpush2.bf16.msra.mxu0 0
        %1727 = vmatprep.subr.bf16.mxu0 0
        %1728 = vmatpush2.bf16.msra.mxu0 0
        %1729 = vmatprep.subr.bf16.mxu0 0
        %1730 = vmatpush2.bf16.msra.mxu0 0
        %1731 = vmatprep.subr.bf16.mxu0 0
        %1732 = vmatpush2.bf16.msra.mxu0 0
        %1733 = vmatprep.subr.bf16.mxu0 0
        %1734 = vmatpush2.bf16.msra.mxu0 0
        %1735 = vmatprep.subr.bf16.mxu0 0
        %1736 = vmatpush2.bf16.msra.mxu0 0
        %1737 = vmatprep.subr.bf16.mxu0 0
        %1738 = vmatpush2.bf16.msra.mxu0 0
        %1739 = vmatprep.mubr.bf16.mxu0 0
        %1740 = vmatmul.mubr.bf16.gmra.mxu0 %v1684
        %v1741 = vpop.f32.mrf.mxu0
        %v1742 = vadd.f32 0.0, %v1741
        %v1743 = vpop.f32.mrf.mxu0
        %v1744 = vpop.f32.mrf.mxu0
        %v1745 = vadd.f32 0.0, %v1744
        %v1746 = vpop.f32.mrf.mxu0
        %1747 = vmatprep.mubr.bf16.mxu0 0
        %1748 = vmatmul.mubr.bf16.gmra.mxu0 %v1687
        %v1749 = vpop.f32.mrf.mxu0
        %v1750 = vadd.f32 0.0, %v1749
        %v1751 = vpop.f32.mrf.mxu0
        %v1752 = vpop.f32.mrf.mxu0
        %v1753 = vadd.f32 0.0, %v1752
        %v1754 = vpop.f32.mrf.mxu0
        %1755 = vmatprep.mubr.bf16.mxu0 0
        %1756 = vmatmul.mubr.bf16.gmra.mxu0 %v1690
        %v1757 = vpop.f32.mrf.mxu0
        %v1758 = vadd.f32 0.0, %v1757
        %v1759 = vpop.f32.mrf.mxu0
        %v1760 = vpop.f32.mrf.mxu0
        %v1761 = vadd.f32 0.0, %v1760
        %v1762 = vpop.f32.mrf.mxu0
        %1763 = vmatprep.mubr.bf16.mxu0 0
        %1764 = vmatmul.mubr.bf16.gmra.mxu0 %v1693
        %v1765 = vpop.f32.mrf.mxu0
        %v1766 = vadd.f32 0.0, %v1765
        %v1767 = vpop.f32.mrf.mxu0
        %v1768 = vpop.f32.mrf.mxu0
        %v1769 = vadd.f32 0.0, %v1768
        %v1770 = vpop.f32.mrf.mxu0
        %1771 = vmatprep.mubr.bf16.mxu0 0
        %1772 = vmatmul.mubr.bf16.gmra.mxu0 %v1696
        %v1773 = vpop.f32.mrf.mxu0
        %v1774 = vadd.f32 0.0, %v1773
        %v1775 = vpop.f32.mrf.mxu0
        %v1776 = vpop.f32.mrf.mxu0
        %v1777 = vadd.f32 0.0, %v1776
        %v1778 = vpop.f32.mrf.mxu0
        %1779 = vmatprep.mubr.bf16.mxu0 0
        %1780 = vmatmul.mubr.bf16.gmra.mxu0 %v1699
        %v1781 = vpop.f32.mrf.mxu0
        %v1782 = vadd.f32 0.0, %v1781
        %v1783 = vpop.f32.mrf.mxu0
        %v1784 = vpop.f32.mrf.mxu0
        %v1785 = vadd.f32 0.0, %v1784
        %v1786 = vpop.f32.mrf.mxu0
        %1787 = vmatprep.mubr.bf16.mxu0 0
        %1788 = vmatmul.mubr.bf16.gmra.mxu0 %v1702
        %v1789 = vpop.f32.mrf.mxu0
        %v1790 = vadd.f32 0.0, %v1789
        %v1791 = vpop.f32.mrf.mxu0
        %v1792 = vpop.f32.mrf.mxu0
        %v1793 = vadd.f32 0.0, %v1792
        %v1794 = vpop.f32.mrf.mxu0
        %1795 = vmatprep.mubr.bf16.mxu0 0
        %1796 = vmatmul.mubr.bf16.gmra.mxu0 %v1705
        %v1797 = vpop.f32.mrf.mxu0
        %v1798 = vadd.f32 0.0, %v1797
        %v1799 = vpop.f32.mrf.mxu0
        %v1800 = vpop.f32.mrf.mxu0
        %v1801 = vadd.f32 0.0, %v1800
        %v1802 = vpop.f32.mrf.mxu0
        %1803 = vdwg.mxu0
        %v1804 = vadd.f32 %v1643, %v1742
        %v1805 = vadd.f32 %v1644, %v1745
        %v1806 = vadd.f32 %v1645, %v1750
        %v1807 = vadd.f32 %v1646, %v1753
        %v1808 = vadd.f32 %v1647, %v1758
        %v1809 = vadd.f32 %v1648, %v1761
        %v1810 = vadd.f32 %v1649, %v1766
        %v1811 = vadd.f32 %v1650, %v1769
        %v1812 = vadd.f32 %v1651, %v1774
        %v1813 = vadd.f32 %v1652, %v1777
        %v1814 = vadd.f32 %v1653, %v1782
        %v1815 = vadd.f32 %v1654, %v1785
        %v1816 = vadd.f32 %v1655, %v1790
        %v1817 = vadd.f32 %v1656, %v1793
        %v1818 = vadd.f32 %v1657, %v1798
        %v1819 = vadd.f32 %v1658, %v1801
        %1820 = vst [vmem:[#allocation2] sm:$0xff] %v1804
        %1821 = vst [vmem:[#allocation2 + $0x8] sm:$0xff] %v1805
        %1822 = vst [vmem:[#allocation2 + $0x10] sm:$0xff] %v1806
        %1823 = vst [vmem:[#allocation2 + $0x18] sm:$0xff] %v1807
        %1824 = vst [vmem:[#allocation2 + $0x20] sm:$0xff] %v1808
        %1825 = vst [vmem:[#allocation2 + $0x28] sm:$0xff] %v1809
        %1826 = vst [vmem:[#allocation2 + $0x30] sm:$0xff] %v1810
        %1827 = vst [vmem:[#allocation2 + $0x38] sm:$0xff] %v1811
        %1828 = vst [vmem:[#allocation2 + $0x40] sm:$0xff] %v1812
        %1829 = vst [vmem:[#allocation2 + $0x48] sm:$0xff] %v1813
        %1830 = vst [vmem:[#allocation2 + $0x50] sm:$0xff] %v1814
        %1831 = vst [vmem:[#allocation2 + $0x58] sm:$0xff] %v1815
        %1832 = vst [vmem:[#allocation2 + $0x60] sm:$0xff] %v1816
        %1833 = vst [vmem:[#allocation2 + $0x68] sm:$0xff] %v1817
        %1834 = vst [vmem:[#allocation2 + $0x70] sm:$0xff] %v1818
        %1835 = vst [vmem:[#allocation2 + $0x78] sm:$0xff] %v1819
        %p1836 = scmp.eq.s32.totalorder %s28, 3
        // Predicated region
        $region61: #{tpu_custom_call.1} parent=55 // pred_check
          %p1837 = pneg %p1836
        $region62: #{tpu_custom_call.1} parent=55 // pred_check_branch
          %1839 = sbr.rel (%p1837) target = $region64
        $region63: #{tpu_custom_call.1} parent=55 // pred_region
          %v1840 = vld [vmem:[%s409] sm:$0xff]
          %v1841 = vld [vmem:[%s409 + $0x8] sm:$0xff]
          %v1842 = vld [vmem:[%s409 + $0x10] sm:$0xff]
          %v1843 = vld [vmem:[%s409 + $0x18] sm:$0xff]
          %v1844 = vld [vmem:[%s409 + $0x20] sm:$0xff]
          %v1845 = vld [vmem:[%s409 + $0x28] sm:$0xff]
          %v1846 = vld [vmem:[%s409 + $0x30] sm:$0xff]
          %v1847 = vld [vmem:[%s409 + $0x38] sm:$0xff]
          %v1848 = vld [vmem:[%s409 + $0x40] sm:$0xff]
          %v1849 = vld [vmem:[%s409 + $0x48] sm:$0xff]
          %v1850 = vld [vmem:[%s409 + $0x50] sm:$0xff]
          %v1851 = vld [vmem:[%s409 + $0x58] sm:$0xff]
          %v1852 = vld [vmem:[%s409 + $0x60] sm:$0xff]
          %v1853 = vld [vmem:[%s409 + $0x68] sm:$0xff]
          %v1854 = vld [vmem:[%s409 + $0x70] sm:$0xff]
          %v1855 = vld [vmem:[%s409 + $0x78] sm:$0xff]
          %v1856 = vld [vmem:[#allocation2] sm:$0xff]
          %v1857 = vld [vmem:[#allocation2 + $0x8] sm:$0xff]
          %v1858 = vld [vmem:[#allocation2 + $0x10] sm:$0xff]
          %v1859 = vld [vmem:[#allocation2 + $0x18] sm:$0xff]
          %v1860 = vld [vmem:[#allocation2 + $0x20] sm:$0xff]
          %v1861 = vld [vmem:[#allocation2 + $0x28] sm:$0xff]
          %v1862 = vld [vmem:[#allocation2 + $0x30] sm:$0xff]
          %v1863 = vld [vmem:[#allocation2 + $0x38] sm:$0xff]
          %v1864 = vld [vmem:[#allocation2 + $0x40] sm:$0xff]
          %v1865 = vld [vmem:[#allocation2 + $0x48] sm:$0xff]
          %v1866 = vld [vmem:[#allocation2 + $0x50] sm:$0xff]
          %v1867 = vld [vmem:[#allocation2 + $0x58] sm:$0xff]
          %v1868 = vld [vmem:[#allocation2 + $0x60] sm:$0xff]
          %v1869 = vld [vmem:[#allocation2 + $0x68] sm:$0xff]
          %v1870 = vld [vmem:[#allocation2 + $0x70] sm:$0xff]
          %v1871 = vld [vmem:[#allocation2 + $0x78] sm:$0xff]
          %v1872 = vadd.f32 %v1840, %v1856
          %v1873 = vadd.f32 %v1841, %v1857
          %v1874 = vadd.f32 %v1842, %v1858
          %v1875 = vadd.f32 %v1843, %v1859
          %v1876 = vadd.f32 %v1844, %v1860
          %v1877 = vadd.f32 %v1845, %v1861
          %v1878 = vadd.f32 %v1846, %v1862
          %v1879 = vadd.f32 %v1847, %v1863
          %v1880 = vadd.f32 %v1848, %v1864
          %v1881 = vadd.f32 %v1849, %v1865
          %v1882 = vadd.f32 %v1850, %v1866
          %v1883 = vadd.f32 %v1851, %v1867
          %v1884 = vadd.f32 %v1852, %v1868
          %v1885 = vadd.f32 %v1853, %v1869
          %v1886 = vadd.f32 %v1854, %v1870
          %v1887 = vadd.f32 %v1855, %v1871
          %1888 = vadd.xlane.f32.xlu0 %v1872
          %v1889 = vpop.xlane.xlu0 %1888
          %1890 = vadd.xlane.f32.xlu0 %v1873
          %v1891 = vpop.xlane.xlu0 %1890
          %1892 = vadd.xlane.f32.xlu0 %v1874
          %v1893 = vpop.xlane.xlu0 %1892
          %1894 = vadd.xlane.f32.xlu0 %v1875
          %v1895 = vpop.xlane.xlu0 %1894
          %1896 = vadd.xlane.f32.xlu0 %v1876
          %v1897 = vpop.xlane.xlu0 %1896
          %1898 = vadd.xlane.f32.xlu0 %v1877
          %v1899 = vpop.xlane.xlu0 %1898
          %1900 = vadd.xlane.f32.xlu0 %v1878
          %v1901 = vpop.xlane.xlu0 %1900
          %1902 = vadd.xlane.f32.xlu0 %v1879
          %v1903 = vpop.xlane.xlu0 %1902
          %1904 = vadd.xlane.f32.xlu0 %v1880
          %v1905 = vpop.xlane.xlu0 %1904
          %1906 = vadd.xlane.f32.xlu0 %v1881
          %v1907 = vpop.xlane.xlu0 %1906
          %1908 = vadd.xlane.f32.xlu0 %v1882
          %v1909 = vpop.xlane.xlu0 %1908
          %1910 = vadd.xlane.f32.xlu0 %v1883
          %v1911 = vpop.xlane.xlu0 %1910
          %1912 = vadd.xlane.f32.xlu0 %v1884
          %v1913 = vpop.xlane.xlu0 %1912
          %1914 = vadd.xlane.f32.xlu0 %v1885
          %v1915 = vpop.xlane.xlu0 %1914
          %1916 = vadd.xlane.f32.xlu0 %v1886
          %v1917 = vpop.xlane.xlu0 %1916
          %1918 = vadd.xlane.f32.xlu0 %v1887
          %v1919 = vpop.xlane.xlu0 %1918
          %v1920 = vrcp.pop 128.0
          %v1921 = vmul.f32 %v1889, %v1920
          %v1922 = vmul.f32 %v1891, %v1920
          %v1923 = vmul.f32 %v1893, %v1920
          %v1924 = vmul.f32 %v1895, %v1920
          %v1925 = vmul.f32 %v1897, %v1920
          %v1926 = vmul.f32 %v1899, %v1920
          %v1927 = vmul.f32 %v1901, %v1920
          %v1928 = vmul.f32 %v1903, %v1920
          %v1929 = vmul.f32 %v1905, %v1920
          %v1930 = vmul.f32 %v1907, %v1920
          %v1931 = vmul.f32 %v1909, %v1920
          %v1932 = vmul.f32 %v1911, %v1920
          %v1933 = vmul.f32 %v1913, %v1920
          %v1934 = vmul.f32 %v1915, %v1920
          %v1935 = vmul.f32 %v1917, %v1920
          %v1936 = vmul.f32 %v1919, %v1920
          %v1937 = vsub.f32 %v1872, %v1921
          %v1938 = vsub.f32 %v1873, %v1922
          %v1939 = vsub.f32 %v1874, %v1923
          %v1940 = vsub.f32 %v1875, %v1924
          %v1941 = vsub.f32 %v1876, %v1925
          %v1942 = vsub.f32 %v1877, %v1926
          %v1943 = vsub.f32 %v1878, %v1927
          %v1944 = vsub.f32 %v1879, %v1928
          %v1945 = vsub.f32 %v1880, %v1929
          %v1946 = vsub.f32 %v1881, %v1930
          %v1947 = vsub.f32 %v1882, %v1931
          %v1948 = vsub.f32 %v1883, %v1932
          %v1949 = vsub.f32 %v1884, %v1933
          %v1950 = vsub.f32 %v1885, %v1934
          %v1951 = vsub.f32 %v1886, %v1935
          %v1952 = vsub.f32 %v1887, %v1936
          %v1953 = vmul.f32 %v1937, %v1937
          %v1954 = vmul.f32 %v1938, %v1938
          %v1955 = vmul.f32 %v1939, %v1939
          %v1956 = vmul.f32 %v1940, %v1940
          %v1957 = vmul.f32 %v1941, %v1941
          %v1958 = vmul.f32 %v1942, %v1942
          %v1959 = vmul.f32 %v1943, %v1943
          %v1960 = vmul.f32 %v1944, %v1944
          %v1961 = vmul.f32 %v1945, %v1945
          %v1962 = vmul.f32 %v1946, %v1946
          %v1963 = vmul.f32 %v1947, %v1947
          %v1964 = vmul.f32 %v1948, %v1948
          %v1965 = vmul.f32 %v1949, %v1949
          %v1966 = vmul.f32 %v1950, %v1950
          %v1967 = vmul.f32 %v1951, %v1951
          %v1968 = vmul.f32 %v1952, %v1952
          %1969 = vadd.xlane.f32.xlu0 %v1953
          %v1970 = vpop.xlane.xlu0 %1969
          %1971 = vadd.xlane.f32.xlu0 %v1954
          %v1972 = vpop.xlane.xlu0 %1971
          %1973 = vadd.xlane.f32.xlu0 %v1955
          %v1974 = vpop.xlane.xlu0 %1973
          %1975 = vadd.xlane.f32.xlu0 %v1956
          %v1976 = vpop.xlane.xlu0 %1975
          %1977 = vadd.xlane.f32.xlu0 %v1957
          %v1978 = vpop.xlane.xlu0 %1977
          %1979 = vadd.xlane.f32.xlu0 %v1958
          %v1980 = vpop.xlane.xlu0 %1979
          %1981 = vadd.xlane.f32.xlu0 %v1959
          %v1982 = vpop.xlane.xlu0 %1981
          %1983 = vadd.xlane.f32.xlu0 %v1960
          %v1984 = vpop.xlane.xlu0 %1983
          %1985 = vadd.xlane.f32.xlu0 %v1961
          %v1986 = vpop.xlane.xlu0 %1985
          %1987 = vadd.xlane.f32.xlu0 %v1962
          %v1988 = vpop.xlane.xlu0 %1987
          %1989 = vadd.xlane.f32.xlu0 %v1963
          %v1990 = vpop.xlane.xlu0 %1989
          %1991 = vadd.xlane.f32.xlu0 %v1964
          %v1992 = vpop.xlane.xlu0 %1991
          %1993 = vadd.xlane.f32.xlu0 %v1965
          %v1994 = vpop.xlane.xlu0 %1993
          %1995 = vadd.xlane.f32.xlu0 %v1966
          %v1996 = vpop.xlane.xlu0 %1995
          %1997 = vadd.xlane.f32.xlu0 %v1967
          %v1998 = vpop.xlane.xlu0 %1997
          %1999 = vadd.xlane.f32.xlu0 %v1968
          %v2000 = vpop.xlane.xlu0 %1999
          %v2001 = vmul.f32 %v1970, %v1920
          %v2002 = vmul.f32 %v1972, %v1920
          %v2003 = vmul.f32 %v1974, %v1920
          %v2004 = vmul.f32 %v1976, %v1920
          %v2005 = vmul.f32 %v1978, %v1920
          %v2006 = vmul.f32 %v1980, %v1920
          %v2007 = vmul.f32 %v1982, %v1920
          %v2008 = vmul.f32 %v1984, %v1920
          %v2009 = vmul.f32 %v1986, %v1920
          %v2010 = vmul.f32 %v1988, %v1920
          %v2011 = vmul.f32 %v1990, %v1920
          %v2012 = vmul.f32 %v1992, %v1920
          %v2013 = vmul.f32 %v1994, %v1920
          %v2014 = vmul.f32 %v1996, %v1920
          %v2015 = vmul.f32 %v1998, %v1920
          %v2016 = vmul.f32 %v2000, %v1920
          %v2017 = vadd.f32 %v2001, 1e-05
          %v2018 = vadd.f32 %v2002, 1e-05
          %v2019 = vadd.f32 %v2003, 1e-05
          %v2020 = vadd.f32 %v2004, 1e-05
          %v2021 = vadd.f32 %v2005, 1e-05
          %v2022 = vadd.f32 %v2006, 1e-05
          %v2023 = vadd.f32 %v2007, 1e-05
          %v2024 = vadd.f32 %v2008, 1e-05
          %v2025 = vadd.f32 %v2009, 1e-05
          %v2026 = vadd.f32 %v2010, 1e-05
          %v2027 = vadd.f32 %v2011, 1e-05
          %v2028 = vadd.f32 %v2012, 1e-05
          %v2029 = vadd.f32 %v2013, 1e-05
          %v2030 = vadd.f32 %v2014, 1e-05
          %v2031 = vadd.f32 %v2015, 1e-05
          %v2032 = vadd.f32 %v2016, 1e-05
          %v2033 = vrsqrt.pop %v2017
          %v2034 = vrsqrt.pop %v2018
          %v2035 = vrsqrt.pop %v2019
          %v2036 = vrsqrt.pop %v2020
          %v2037 = vrsqrt.pop %v2021
          %v2038 = vrsqrt.pop %v2022
          %v2039 = vrsqrt.pop %v2023
          %v2040 = vrsqrt.pop %v2024
          %v2041 = vrsqrt.pop %v2025
          %v2042 = vrsqrt.pop %v2026
          %v2043 = vrsqrt.pop %v2027
          %v2044 = vrsqrt.pop %v2028
          %v2045 = vrsqrt.pop %v2029
          %v2046 = vrsqrt.pop %v2030
          %v2047 = vrsqrt.pop %v2031
          %v2048 = vrsqrt.pop %v2032
          %v2049 = vmul.f32 %v1937, %v2033
          %v2050 = vmul.f32 %v1938, %v2034
          %v2051 = vmul.f32 %v1939, %v2035
          %v2052 = vmul.f32 %v1940, %v2036
          %v2053 = vmul.f32 %v1941, %v2037
          %v2054 = vmul.f32 %v1942, %v2038
          %v2055 = vmul.f32 %v1943, %v2039
          %v2056 = vmul.f32 %v1944, %v2040
          %v2057 = vmul.f32 %v1945, %v2041
          %v2058 = vmul.f32 %v1946, %v2042
          %v2059 = vmul.f32 %v1947, %v2043
          %v2060 = vmul.f32 %v1948, %v2044
          %v2061 = vmul.f32 %v1949, %v2045
          %v2062 = vmul.f32 %v1950, %v2046
          %v2063 = vmul.f32 %v1951, %v2047
          %v2064 = vmul.f32 %v1952, %v2048
          %v2065 = vld [vmem:[%s7] sm:$0x1]
          %v2067 = vlaneseq
          %v2068 = vshrl.u32 %v2067, 7
          %v2069 = vsub.s32 0, %v2068
          %v2070 = vrot.slane %v2065, %v2069
          %v2072 = vmul.f32 %v2049, %v2070
          %v2073 = vmul.f32 %v2050, %v2070
          %v2074 = vmul.f32 %v2051, %v2070
          %v2075 = vmul.f32 %v2052, %v2070
          %v2076 = vmul.f32 %v2053, %v2070
          %v2077 = vmul.f32 %v2054, %v2070
          %v2078 = vmul.f32 %v2055, %v2070
          %v2079 = vmul.f32 %v2056, %v2070
          %v2080 = vmul.f32 %v2057, %v2070
          %v2081 = vmul.f32 %v2058, %v2070
          %v2082 = vmul.f32 %v2059, %v2070
          %v2083 = vmul.f32 %v2060, %v2070
          %v2084 = vmul.f32 %v2061, %v2070
          %v2085 = vmul.f32 %v2062, %v2070
          %v2086 = vmul.f32 %v2063, %v2070
          %v2087 = vmul.f32 %v2064, %v2070
          %v2088 = vld [vmem:[%s8] sm:$0x1]
          %v2090 = vlaneseq
          %v2091 = vshrl.u32 %v2090, 7
          %v2092 = vsub.s32 0, %v2091
          %v2093 = vrot.slane %v2088, %v2092
          %v2095 = vadd.f32 %v2072, %v2093
          %v2096 = vadd.f32 %v2073, %v2093
          %v2097 = vadd.f32 %v2074, %v2093
          %v2098 = vadd.f32 %v2075, %v2093
          %v2099 = vadd.f32 %v2076, %v2093
          %v2100 = vadd.f32 %v2077, %v2093
          %v2101 = vadd.f32 %v2078, %v2093
          %v2102 = vadd.f32 %v2079, %v2093
          %v2103 = vadd.f32 %v2080, %v2093
          %v2104 = vadd.f32 %v2081, %v2093
          %v2105 = vadd.f32 %v2082, %v2093
          %v2106 = vadd.f32 %v2083, %v2093
          %v2107 = vadd.f32 %v2084, %v2093
          %v2108 = vadd.f32 %v2085, %v2093
          %v2109 = vadd.f32 %v2086, %v2093
          %v2110 = vadd.f32 %v2087, %v2093
          %2111 = vst [vmem:[%s404] sm:$0xff] %v2095
          %2112 = vst [vmem:[%s404 + $0x8] sm:$0xff] %v2096
          %2113 = vst [vmem:[%s404 + $0x10] sm:$0xff] %v2097
          %2114 = vst [vmem:[%s404 + $0x18] sm:$0xff] %v2098
          %2115 = vst [vmem:[%s404 + $0x20] sm:$0xff] %v2099
          %2116 = vst [vmem:[%s404 + $0x28] sm:$0xff] %v2100
          %2117 = vst [vmem:[%s404 + $0x30] sm:$0xff] %v2101
          %2118 = vst [vmem:[%s404 + $0x38] sm:$0xff] %v2102
          %2119 = vst [vmem:[%s404 + $0x40] sm:$0xff] %v2103
          %2120 = vst [vmem:[%s404 + $0x48] sm:$0xff] %v2104
          %2121 = vst [vmem:[%s404 + $0x50] sm:$0xff] %v2105
          %2122 = vst [vmem:[%s404 + $0x58] sm:$0xff] %v2106
          %2123 = vst [vmem:[%s404 + $0x60] sm:$0xff] %v2107
          %2124 = vst [vmem:[%s404 + $0x68] sm:$0xff] %v2108
          %2125 = vst [vmem:[%s404 + $0x70] sm:$0xff] %v2109
          %2126 = vst [vmem:[%s404 + $0x78] sm:$0xff] %v2110
        $region64: #{tpu_custom_call.1} parent=55 // pred_fallthru
          _
        %s2127 = sand.u32 %s262, 1
        %s2128 = scalar_lea.sflag [#allocation4], %s2127
        %s2129 = sand.u32 %s262, 1
        %s2130 = smul.addr %s2129, 128
        %s2131 = scalar_lea.vmem [#allocation3], %s2130
        // Predicated region
        $region65: #{tpu_custom_call.1} parent=55 // pred_check
          %p2132 = pneg %p272
        $region66: #{tpu_custom_call.1} parent=55 // pred_check_branch
          %2134 = sbr.rel (%p2132) target = $region68
        $region67: #{tpu_custom_call.1} parent=55 // pred_region
          %s2136 = ssub.s32 2048, 2048
          %2137 = vsyncadd %s2128, %s2136
          %s2138 = smul.addr %s27, 16
          %s2139 = smul.addr %s2138, 128
          %s2140 = scalar_lea.hbm %s9, %s2139
          %s2141 = sshll.u32 %s2131, 4
          %s2142 = int_to_ptr.vmem [resolvable:$true] %s2141
          %2147 = dma.vmem_to_hbm [thread:$0]  %s2142, 2048, %s2140, %s2128, 128, 128, 8
        $region68: #{tpu_custom_call.1} parent=55 // pred_fallthru
          _
      $region56: #{tpu_custom_call.1} parent=5 // pred_fallthru
        _
      %p2148 = scmp.le.s32.totalorder 2, %s18
      // Predicated region
      $region69: #{tpu_custom_call.1} parent=5 // pred_check
        %p2149 = pneg %p2148
      $region70: #{tpu_custom_call.1} parent=5 // pred_check_branch
        %2151 = sbr.rel (%p2149) target = $region72
      $region71: #{tpu_custom_call.1} parent=5 // pred_region
        %s2152 = ssub.s32 %s18, 2
        // Predicated region
        $region73: #{tpu_custom_call.1} parent=71 // pred_check
          %p2153 = pneg %p278
        $region74: #{tpu_custom_call.1} parent=71 // pred_check_branch
          %2155 = sbr.rel (%p2153) target = $region76
        $region75: #{tpu_custom_call.1} parent=71 // pred_region
          %s2156 = sand.u32 %s263, 1
          %s2157 = scalar_lea.sflag [#allocation4], %s2156
          %s2158 = sand.u32 %s263, 1
          %s2159 = smul.addr %s2158, 128
          %s2160 = scalar_lea.vmem [#allocation3], %s2159
          %2161 = dma.done %s2157, 2048
        $region76: #{tpu_custom_call.1} parent=71 // pred_fallthru
          _
      $region72: #{tpu_custom_call.1} parent=5 // pred_fallthru
        _
    $region6: #{tpu_custom_call.1} parent=1 // loop_footer
      %s22 = sadd.s32 1, %s18
    $region7: #{tpu_custom_call.1} parent=1 // loop_footer_branch
      %17 = sbr.rel target = $region3
    $region8: #{tpu_custom_call.1} parent=1 // loop_exit
      _
    %2162 = vsyncpa [#allocation4], 1
    %s2163 = scalar_lea.sflag [#allocation4], 1
    %2164 = vsyncpa %s2163, 1

</llo_original>
